<compile_context>
chip_gen: v7x
topology: tpu7x:2x2x1
jax: 0.10.0
libtpu: 0.0.40
codegen_flags: <defaults>
</compile_context>

<pallas_src>
import functools

import jax
import jax.numpy as jnp
import numpy as np
from jax.experimental import pallas as pl
from jax.experimental.pallas import tpu as pltpu

LN_EPS = 1e-5
LANE = 128


def _round_up(n, m=LANE):
    return ((n + m - 1) // m) * m


def _layer_norm_padded(r, gamma, beta, d_real):
    """LayerNorm over the real (unpadded) feature dim.

    Padded lanes of `r` are exactly zero by construction, so sum(r)/d_real and
    sum(r*r)/d_real give the real mean / E[x^2]; gamma/beta are zero-padded so the
    padded lanes of the result stay zero (needed for the residual / next matmul).
    """
    inv_d = 1.0 / float(d_real)
    mu = jnp.sum(r, axis=-1, keepdims=True) * inv_d
    ex2 = jnp.sum(r * r, axis=-1, keepdims=True) * inv_d
    var = ex2 - mu * mu
    return (r - mu) * jax.lax.rsqrt(var + LN_EPS) * gamma + beta


def transformer_layer_kernel(
    x_ref,                       # (Bblk, T, Dp)               f32 (padded lanes zero)
    wq_ref, bq_ref,              # (Dp, H*Dkp) bf16, (1, H*Dkp) f32
    wk_ref, bk_ref,              # (Dp, H*Dkp) bf16, (1, H*Dkp) f32
    wv_ref, bv_ref,              # (Dp, H*Dp)  bf16, (1, H*Dp)  f32
    wo_ref, bo_ref,              # (H*Dkp, Dp) bf16, (1, Dp)    f32
    g1_ref, be1_ref,             # (1, Dp), (1, Dp)             f32
    w1_ref, b1_ref,              # (Dp, Hidp) bf16, (1, Hidp)   f32
    w2_ref, b2_ref,              # (Hidp, Dp) bf16, (1, Dp)     f32
    g2_ref, be2_ref,             # (1, Dp), (1, Dp)             f32
    out_ref,                     # (Bblk, T, Dp)                f32
    *maybe_attn_ref,             # optional (Bblk, H, T, T)     f32
    num_heads,                   # static
    d_model,                     # static, real (unpadded) d_model
):
    attn_ref = maybe_attn_ref[0] if maybe_attn_ref else None
    Bblk, T, Dp = x_ref.shape
    H = num_heads
    Dkp = wq_ref.shape[1] // H
    M = Bblk * T
    inv_scale = 1.0 / (float(d_model) ** 0.5)          # WQ.in_features == d_model

    x = x_ref[...].reshape(M, Dp)                      # f32, padded lanes are zero
    x_bf = x.astype(jnp.bfloat16)

    # Fused Q/K/V projections: one wide, lane-dense bf16 MXU matmul each (f32 acc).
    q_all = jnp.dot(x_bf, wq_ref[...], preferred_element_type=jnp.float32) + bq_ref[...]
    k_all = jnp.dot(x_bf, wk_ref[...], preferred_element_type=jnp.float32) + bk_ref[...]
    v_all = jnp.dot(x_bf, wv_ref[...], preferred_element_type=jnp.float32) + bv_ref[...]

    q3 = q_all.reshape(Bblk, T, H * Dkp).astype(jnp.bfloat16)
    k3 = k_all.reshape(Bblk, T, H * Dkp).astype(jnp.bfloat16)
    v3 = v_all.reshape(Bblk, T, H * Dp).astype(jnp.bfloat16)

    # Output projection accumulated per head (no f32 heads-concat scratch slab).
    attn_out = jnp.zeros((M, Dp), jnp.float32) + bo_ref[...]

    # TODO(synk): optional attention mask (masked_fill with -inf before the row max)
    #             is not wired in; the reference forward is exercised with mask=None.
    # TODO(synk): for long sequences (attention maps dropped) restructure as an
    #             online-softmax (flash) loop over K/V tiles instead of full (T,T).
    for h in range(H):                                 # small static head count
        q_h = q3[:, :, h * Dkp:(h + 1) * Dkp]          # (Bblk, T, Dkp) bf16
        k_h = k3[:, :, h * Dkp:(h + 1) * Dkp]
        v_h = v3[:, :, h * Dp:(h + 1) * Dp]            # (Bblk, T, Dp)  bf16

        # Batched over the folded batch dim: one MXU pass per head, not per (b, h).
        s = jnp.einsum('btd,bsd->bts', q_h, k_h,
                       preferred_element_type=jnp.float32) * inv_scale
        s = s - jnp.max(s, axis=-1, keepdims=True)
        e = jnp.exp(s)
        a = e / jnp.sum(e, axis=-1, keepdims=True)     # exact row-normalization
        if attn_ref is not None:
            attn_ref[:, h, :, :] = a

        pv = jnp.einsum('bts,bsd->btd', a.astype(jnp.bfloat16), v_h,
                        preferred_element_type=jnp.float32)
        attn_out = attn_out + jnp.dot(
            pv.reshape(M, Dp).astype(jnp.bfloat16),
            wo_ref[h * Dkp:(h + 1) * Dkp, :],          # d_internal == d_model => Dkp == Dp
            preferred_element_type=jnp.float32)

    # Residual + LayerNorm 1 (f32, statistics over the real d_model).
    r1 = _layer_norm_padded(x + attn_out, g1_ref[...], be1_ref[...], d_model)

    # Feed-forward: Linear -> ReLU -> Linear (bf16 matmuls, f32 accumulate).
    # TODO(synk): for very large hidden sizes on v7x (64 MiB VMEM) tile Hid on an
    #             "arbitrary" grid axis instead of holding w1/w2 whole in VMEM.
    h1 = jnp.maximum(
        jnp.dot(r1.astype(jnp.bfloat16), w1_ref[...],
                preferred_element_type=jnp.float32) + b1_ref[...], 0.0)
    ff = jnp.dot(h1.astype(jnp.bfloat16), w2_ref[...],
                 preferred_element_type=jnp.float32) + b2_ref[...]

    # Residual + LayerNorm 2 (f32).
    r2 = _layer_norm_padded(r1 + ff, g2_ref[...], be2_ref[...], d_model)
    out_ref[...] = r2.reshape(Bblk, T, Dp).astype(out_ref.dtype)


def _pick_b_block(B, T, target_rows=512, min_grid=2):
    """Largest divisor of B with b_block*T <= target_rows while keeping at least
    min_grid grid steps (so both v7x TensorCores get work); graceful for tiny B."""
    need = min(min_grid, B)
    best = 1
    for c in range(1, B + 1):
        if B % c == 0 and c * T <= target_rows and B // c >= need:
            best = c
    return best


def _fuse_heads(w, d_in_p, d_out_p):
    """(H, d_in, d_out) -> (d_in_p, H*d_out_p); head h occupies cols [h*d_out_p, ...)."""
    H, d_in, d_out = w.shape
    wp = jnp.pad(w, ((0, 0), (0, d_in_p - d_in), (0, d_out_p - d_out)))
    return jnp.transpose(wp, (1, 0, 2)).reshape(d_in_p, H * d_out_p)


def _fuse_head_bias(b, d_out_p):
    H, d_out = b.shape
    return jnp.pad(b, ((0, 0), (0, d_out_p - d_out))).reshape(1, H * d_out_p)


def _pad2d(a, rows, cols):
    return jnp.pad(a, ((0, rows - a.shape[0]), (0, cols - a.shape[1])))


def transformer_layer(x, params, *, b_block=None, return_attn_maps=True,
                      target_rows=512):
    B, T, D = x.shape
    H, _, Dk = params["wq"].shape
    Hid = params["w1"].shape[1]
    assert Dk == D, "reference module only type-checks when d_internal == d_model"

    Dp, Dkp, Hidp = _round_up(D), _round_up(Dk), _round_up(Hid)

    if b_block is None:
        b_block = _pick_b_block(B, T, target_rows=target_rows)
    assert B % b_block == 0
    grid = (B // b_block,)

    bf16, f32 = jnp.bfloat16, jnp.float32

    # Zero-pad + fuse weights once in the wrapper; kernel only sees lane-dense shapes.
    wq = _fuse_heads(params["wq"], Dp, Dkp).astype(bf16)
    wk = _fuse_heads(params["wk"], Dp, Dkp).astype(bf16)
    wv = _fuse_heads(params["wv"], Dp, Dp).astype(bf16)
    bq = _fuse_head_bias(params["bq"], Dkp).astype(f32)
    bk = _fuse_head_bias(params["bk"], Dkp).astype(f32)
    bv = _fuse_head_bias(params["bv"], Dp).astype(f32)

    wo = params["wo"].reshape(H, Dk, D)
    wo = jnp.pad(wo, ((0, 0), (0, Dkp - Dk), (0, Dp - D))).reshape(H * Dkp, Dp).astype(bf16)
    bo = _pad2d(params["bo"], 1, Dp).astype(f32)

    w1 = _pad2d(params["w1"], Dp, Hidp).astype(bf16)
    b1 = _pad2d(params["b1"], 1, Hidp).astype(f32)
    w2 = _pad2d(params["w2"], Hidp, Dp).astype(bf16)
    b2 = _pad2d(params["b2"], 1, Dp).astype(f32)

    g1 = _pad2d(params["g1"], 1, Dp).astype(f32)      # zero pad -> padded lanes stay zero
    be1 = _pad2d(params["be1"], 1, Dp).astype(f32)
    g2 = _pad2d(params["g2"], 1, Dp).astype(f32)
    be2 = _pad2d(params["be2"], 1, Dp).astype(f32)

    # TODO(synk): if the surrounding model runs in bf16, accept/emit bf16 activations
    #             here (keep in-kernel LN/residual math in f32) to halve streaming DMA.
    x_p = jnp.pad(x.astype(f32), ((0, 0), (0, 0), (0, Dp - D)))

    operands = [x_p, wq, bq, wk, bk, wv, bv, wo, bo,
                g1, be1, w1, b1, w2, b2, g2, be2]

    # x is streamed per grid step; every other operand is constant -> single-buffered.
    in_specs = [pl.BlockSpec((b_block, T, Dp), lambda i: (i, 0, 0))]
    for a in operands[1:]:
        nd = a.ndim
        in_specs.append(
            pl.BlockSpec(a.shape, lambda i, _nd=nd: (0,) * _nd,
                         pipeline_mode=pl.Buffered(1)))

    out_specs = [pl.BlockSpec((b_block, T, Dp), lambda i: (i, 0, 0))]
    out_shapes = [jax.ShapeDtypeStruct((B, T, Dp), f32)]
    if return_attn_maps:
        # TODO(synk): at long T the f32 (B,H,T,T) maps dominate HBM/VMEM traffic;
        #             prefer return_attn_maps=False (flash-style) in that regime.
        out_specs.append(pl.BlockSpec((b_block, H, T, T), lambda i: (i, 0, 0, 0)))
        out_shapes.append(jax.ShapeDtypeStruct((B, H, T, T), f32))

    kernel = functools.partial(transformer_layer_kernel, num_heads=H, d_model=D)

    call = pl.pallas_call(
        kernel,
        out_shape=tuple(out_shapes),
        grid_spec=pltpu.PrefetchScalarGridSpec(
            num_scalar_prefetch=0,
            grid=grid,
            in_specs=in_specs,
            out_specs=tuple(out_specs),
        ),
        compiler_params=pltpu.CompilerParams(
            dimension_semantics=("parallel",),
            vmem_limit_bytes=64 * 1024 * 1024,
        ),
    )
    results = call(*operands)
    if return_attn_maps:
        out_p, attn = results
        return out_p[:, :, :D], attn
    (out_p,) = results
    return out_p[:, :, :D]


def reference_forward(x, p):
    """Pure-JAX f32 replica of the PyTorch forward (mask=None) for validation."""
    D = x.shape[-1]
    H = p["wq"].shape[0]
    heads, maps = [], []
    for h in range(H):
        q = x @ p["wq"][h] + p["bq"][h]
        k = x @ p["wk"][h] + p["bk"][h]
        v = x @ p["wv"][h] + p["bv"][h]
        s = (q @ jnp.swapaxes(k, -1, -2)) / (D ** 0.5)
        a = jax.nn.softmax(s, axis=-1)
        maps.append(a)
        heads.append(a @ v)
    cat = jnp.concatenate(heads, axis=-1)
    attn_out = cat @ p["wo"] + p["bo"][0]

    def ln(r, g, b):
        mu = r.mean(-1, keepdims=True)
        var = ((r - mu) ** 2).mean(-1, keepdims=True)
        return (r - mu) / jnp.sqrt(var + LN_EPS) * g[0] + b[0]

    r1 = ln(x + attn_out, p["g1"], p["be1"])
    ff = jnp.maximum(r1 @ p["w1"] + p["b1"][0], 0.0) @ p["w2"] + p["b2"][0]
    r2 = ln(r1 + ff, p["g2"], p["be2"])
    return r2, jnp.stack(maps, axis=1)


def init_params(key, d_model, d_internal, num_heads, hidden_size):
    ks = jax.random.split(key, 12)
    sc = 0.1
    return {
        "wq": sc * jax.random.normal(ks[0], (num_heads, d_model, d_internal), jnp.float32),
        "bq": sc * jax.random.normal(ks[1], (num_heads, d_internal), jnp.float32),
        "wk": sc * jax.random.normal(ks[2], (num_heads, d_model, d_internal), jnp.float32),
        "bk": sc * jax.random.normal(ks[3], (num_heads, d_internal), jnp.float32),
        "wv": sc * jax.random.normal(ks[4], (num_heads, d_model, d_model), jnp.float32),
        "bv": sc * jax.random.normal(ks[5], (num_heads, d_model), jnp.float32),
        "wo": sc * jax.random.normal(ks[6], (num_heads * d_internal, d_model), jnp.float32),
        "bo": sc * jax.random.normal(ks[7], (1, d_model), jnp.float32),
        "g1": jnp.ones((1, d_model), jnp.float32),
        "be1": jnp.zeros((1, d_model), jnp.float32),
        "w1": sc * jax.random.normal(ks[8], (d_model, hidden_size), jnp.float32),
        "b1": sc * jax.random.normal(ks[9], (1, hidden_size), jnp.float32),
        "w2": sc * jax.random.normal(ks[10], (hidden_size, d_model), jnp.float32),
        "b2": sc * jax.random.normal(ks[11], (1, d_model), jnp.float32),
        "g2": jnp.ones((1, d_model), jnp.float32),
        "be2": jnp.zeros((1, d_model), jnp.float32),
    }


if __name__ == "__main__":
    B, T = 2, 8
    d_model, d_internal, num_heads, hidden_size = 32, 32, 2, 64  # d_internal == d_model (see NOTE)

    key = jax.random.PRNGKey(0)
    kx, kp = jax.random.split(key)
    x = jax.random.normal(kx, (B, T, d_model), jnp.float32)
    params = init_params(kp, d_model, d_internal, num_heads, hidden_size)

    out, attn_maps = transformer_layer(x, params)
    jax.block_until_ready((out, attn_maps))

    # f32 reference; kernel uses bf16 matmul operands with f32 accumulation, so the
    # comparison tolerance is relaxed accordingly.
    ref_out, ref_maps = reference_forward(x, params)
    np.testing.assert_allclose(np.asarray(out), np.asarray(ref_out), rtol=5e-2, atol=5e-2)
    np.testing.assert_allclose(np.asarray(attn_maps), np.asarray(ref_maps), rtol=5e-2, atol=2e-2)

    print("KERNEL_OK")
</pallas_src>

<mosaic_0001>
module attributes {stable_mosaic.version = 11 : i64} {
  func.func @transformer_layer_kernel(%arg0: i32, %arg1: memref<1x8x128xf32, #tpu.memory_space<vmem>>, %arg2: memref<128x256xbf16, #tpu.memory_space<vmem>>, %arg3: memref<1x256xf32, #tpu.memory_space<vmem>>, %arg4: memref<128x256xbf16, #tpu.memory_space<vmem>>, %arg5: memref<1x256xf32, #tpu.memory_space<vmem>>, %arg6: memref<128x256xbf16, #tpu.memory_space<vmem>>, %arg7: memref<1x256xf32, #tpu.memory_space<vmem>>, %arg8: memref<256x128xbf16, #tpu.memory_space<vmem>>, %arg9: memref<1x128xf32, #tpu.memory_space<vmem>>, %arg10: memref<1x128xf32, #tpu.memory_space<vmem>>, %arg11: memref<1x128xf32, #tpu.memory_space<vmem>>, %arg12: memref<128x128xbf16, #tpu.memory_space<vmem>>, %arg13: memref<1x128xf32, #tpu.memory_space<vmem>>, %arg14: memref<128x128xbf16, #tpu.memory_space<vmem>>, %arg15: memref<1x128xf32, #tpu.memory_space<vmem>>, %arg16: memref<1x128xf32, #tpu.memory_space<vmem>>, %arg17: memref<1x128xf32, #tpu.memory_space<vmem>>, %arg18: memref<1x8x128xf32, #tpu.memory_space<vmem>>, %arg19: memref<1x2x8x8xf32, #tpu.memory_space<vmem>>) attributes {dimension_semantics = [#tpu.dimension_semantics<parallel>], iteration_bounds = array<i64: 2>, scalar_prefetch = 0 : i64, scratch_operands = 0 : i64, tpu.core_type = #tpu.core_type<tc>, window_params = [{transform_indices = @transform_0, window_bounds = array<i64: 1, 8, 128>}, {pipeline_mode = #tpu.pipeline_mode<synchronous>, transform_indices = @transform_1, window_bounds = array<i64: 128, 256>}, {pipeline_mode = #tpu.pipeline_mode<synchronous>, transform_indices = @transform_2, window_bounds = array<i64: 1, 256>}, {pipeline_mode = #tpu.pipeline_mode<synchronous>, transform_indices = @transform_3, window_bounds = array<i64: 128, 256>}, {pipeline_mode = #tpu.pipeline_mode<synchronous>, transform_indices = @transform_4, window_bounds = array<i64: 1, 256>}, {pipeline_mode = #tpu.pipeline_mode<synchronous>, transform_indices = @transform_5, window_bounds = array<i64: 128, 256>}, {pipeline_mode = #tpu.pipeline_mode<synchronous>, transform_indices = @transform_6, window_bounds = array<i64: 1, 256>}, {pipeline_mode = #tpu.pipeline_mode<synchronous>, transform_indices = @transform_7, window_bounds = array<i64: 256, 128>}, {pipeline_mode = #tpu.pipeline_mode<synchronous>, transform_indices = @transform_8, window_bounds = array<i64: 1, 128>}, {pipeline_mode = #tpu.pipeline_mode<synchronous>, transform_indices = @transform_9, window_bounds = array<i64: 1, 128>}, {pipeline_mode = #tpu.pipeline_mode<synchronous>, transform_indices = @transform_10, window_bounds = array<i64: 1, 128>}, {pipeline_mode = #tpu.pipeline_mode<synchronous>, transform_indices = @transform_11, window_bounds = array<i64: 128, 128>}, {pipeline_mode = #tpu.pipeline_mode<synchronous>, transform_indices = @transform_12, window_bounds = array<i64: 1, 128>}, {pipeline_mode = #tpu.pipeline_mode<synchronous>, transform_indices = @transform_13, window_bounds = array<i64: 128, 128>}, {pipeline_mode = #tpu.pipeline_mode<synchronous>, transform_indices = @transform_14, window_bounds = array<i64: 1, 128>}, {pipeline_mode = #tpu.pipeline_mode<synchronous>, transform_indices = @transform_15, window_bounds = array<i64: 1, 128>}, {pipeline_mode = #tpu.pipeline_mode<synchronous>, transform_indices = @transform_16, window_bounds = array<i64: 1, 128>}, {transform_indices = @transform_17, window_bounds = array<i64: 1, 8, 128>}, {transform_indices = @transform_18, window_bounds = array<i64: 1, 2, 8, 8>}]} {
    %c0 = arith.constant 0 : index
    %c0_0 = arith.constant 0 : index
    %c0_1 = arith.constant 0 : index
    %0 = vector.load %arg1[%c0, %c0_0, %c0_1] : memref<1x8x128xf32, #tpu.memory_space<vmem>>, vector<1x8x128xf32>
    %1 = vector.shape_cast %0 : vector<1x8x128xf32> to vector<8x128xf32>
    %2 = arith.truncf %1 : vector<8x128xf32> to vector<8x128xbf16>
    %c0_2 = arith.constant 0 : index
    %c0_3 = arith.constant 0 : index
    %3 = vector.load %arg2[%c0_2, %c0_3] : memref<128x256xbf16, #tpu.memory_space<vmem>>, vector<128x256xbf16>
    %cst = arith.constant dense<0.000000e+00> : vector<8x256xf32>
    %4 = tpu.matmul %2, %3, %cst {dimension_numbers = #tpu.dot_dimension_numbers<[1], [0], [0], [1], [0, 0, 1, 1], [], []>} : vector<8x128xbf16>, vector<128x256xbf16>, vector<8x256xf32> -> vector<8x256xf32>
    %c0_4 = arith.constant 0 : index
    %c0_5 = arith.constant 0 : index
    %5 = vector.load %arg3[%c0_4, %c0_5] : memref<1x256xf32, #tpu.memory_space<vmem>>, vector<1x256xf32>
    %6 = vector.broadcast %5 : vector<1x256xf32> to vector<8x256xf32>
    %7 = arith.addf %4, %6 : vector<8x256xf32>
    %c0_6 = arith.constant 0 : index
    %c0_7 = arith.constant 0 : index
    %8 = vector.load %arg4[%c0_6, %c0_7] : memref<128x256xbf16, #tpu.memory_space<vmem>>, vector<128x256xbf16>
    %cst_8 = arith.constant dense<0.000000e+00> : vector<8x256xf32>
    %9 = tpu.matmul %2, %8, %cst_8 {dimension_numbers = #tpu.dot_dimension_numbers<[1], [0], [0], [1], [0, 0, 1, 1], [], []>} : vector<8x128xbf16>, vector<128x256xbf16>, vector<8x256xf32> -> vector<8x256xf32>
    %c0_9 = arith.constant 0 : index
    %c0_10 = arith.constant 0 : index
    %10 = vector.load %arg5[%c0_9, %c0_10] : memref<1x256xf32, #tpu.memory_space<vmem>>, vector<1x256xf32>
    %11 = vector.broadcast %10 : vector<1x256xf32> to vector<8x256xf32>
    %12 = arith.addf %9, %11 : vector<8x256xf32>
    %c0_11 = arith.constant 0 : index
    %c0_12 = arith.constant 0 : index
    %13 = vector.load %arg6[%c0_11, %c0_12] : memref<128x256xbf16, #tpu.memory_space<vmem>>, vector<128x256xbf16>
    %cst_13 = arith.constant dense<0.000000e+00> : vector<8x256xf32>
    %14 = tpu.matmul %2, %13, %cst_13 {dimension_numbers = #tpu.dot_dimension_numbers<[1], [0], [0], [1], [0, 0, 1, 1], [], []>} : vector<8x128xbf16>, vector<128x256xbf16>, vector<8x256xf32> -> vector<8x256xf32>
    %c0_14 = arith.constant 0 : index
    %c0_15 = arith.constant 0 : index
    %15 = vector.load %arg7[%c0_14, %c0_15] : memref<1x256xf32, #tpu.memory_space<vmem>>, vector<1x256xf32>
    %16 = vector.broadcast %15 : vector<1x256xf32> to vector<8x256xf32>
    %17 = arith.addf %14, %16 : vector<8x256xf32>
    %18 = vector.shape_cast %7 : vector<8x256xf32> to vector<1x8x256xf32>
    %19 = arith.truncf %18 : vector<1x8x256xf32> to vector<1x8x256xbf16>
    %20 = vector.shape_cast %12 : vector<8x256xf32> to vector<1x8x256xf32>
    %21 = arith.truncf %20 : vector<1x8x256xf32> to vector<1x8x256xbf16>
    %22 = vector.shape_cast %17 : vector<8x256xf32> to vector<1x8x256xf32>
    %23 = arith.truncf %22 : vector<1x8x256xf32> to vector<1x8x256xbf16>
    %cst_16 = arith.constant 0.000000e+00 : f32
    %24 = vector.broadcast %cst_16 : f32 to vector<8x128xf32>
    %c0_17 = arith.constant 0 : index
    %c0_18 = arith.constant 0 : index
    %25 = vector.load %arg9[%c0_17, %c0_18] : memref<1x128xf32, #tpu.memory_space<vmem>>, vector<1x128xf32>
    %26 = vector.broadcast %25 : vector<1x128xf32> to vector<8x128xf32>
    %27 = arith.addf %24, %26 : vector<8x128xf32>
    %28 = vector.extract_strided_slice %19 {offsets = [0, 0, 0], sizes = [1, 8, 128], strides = [1, 1, 1]} : vector<1x8x256xbf16> to vector<1x8x128xbf16>
    %29 = vector.extract_strided_slice %21 {offsets = [0, 0, 0], sizes = [1, 8, 128], strides = [1, 1, 1]} : vector<1x8x256xbf16> to vector<1x8x128xbf16>
    %30 = vector.extract_strided_slice %23 {offsets = [0, 0, 0], sizes = [1, 8, 128], strides = [1, 1, 1]} : vector<1x8x256xbf16> to vector<1x8x128xbf16>
    "tpu.trace_start"() <{level = 10 : i32, message = "btd,bsd->bts"}> : () -> ()
    %cst_19 = arith.constant dense<0.000000e+00> : vector<1x8x8xf32>
    %31 = tpu.matmul %28, %29, %cst_19 {dimension_numbers = #tpu.dot_dimension_numbers<[2], [2], [1], [1], [0, 0, 0, 1, 1, 1], [0], [0]>} : vector<1x8x128xbf16>, vector<1x8x128xbf16>, vector<1x8x8xf32> -> vector<1x8x8xf32>
    "tpu.trace_stop"() : () -> ()
    %cst_20 = arith.constant 0.176776692 : f32
    %32 = vector.broadcast %cst_20 : f32 to vector<1x8x8xf32>
    %33 = arith.mulf %31, %32 : vector<1x8x8xf32>
    %cst_21 = arith.constant dense<0xFF800000> : vector<1x8xf32>
    %34 = vector.multi_reduction <maximumf>, %33, %cst_21 [2] : vector<1x8x8xf32> to vector<1x8xf32>
    %35 = vector.shape_cast %34 : vector<1x8xf32> to vector<1x8x1xf32>
    %36 = vector.broadcast %35 : vector<1x8x1xf32> to vector<1x8x8xf32>
    %37 = arith.subf %33, %36 : vector<1x8x8xf32>
    %38 = math.exp %37 : vector<1x8x8xf32>
    %cst_22 = arith.constant dense<0.000000e+00> : vector<1x8xf32>
    %39 = vector.multi_reduction <add>, %38, %cst_22 [2] : vector<1x8x8xf32> to vector<1x8xf32>
    %40 = vector.shape_cast %39 : vector<1x8xf32> to vector<1x8x1xf32>
    %41 = vector.broadcast %40 : vector<1x8x1xf32> to vector<1x8x8xf32>
    %42 = arith.divf %38, %41 : vector<1x8x8xf32>
    %c0_23 = arith.constant 0 : index
    %c0_24 = arith.constant 0 : index
    %c0_25 = arith.constant 0 : index
    %c0_26 = arith.constant 0 : index
    %43 = vector.load %arg19[%c0_23, %c0_24, %c0_25, %c0_26] : memref<1x2x8x8xf32, #tpu.memory_space<vmem>>, vector<1x1x8x8xf32>
    %44 = vector.shape_cast %43 : vector<1x1x8x8xf32> to vector<1x8x8xf32>
    %45 = vector.shape_cast %42 : vector<1x8x8xf32> to vector<1x1x8x8xf32>
    tpu.vector_store %arg19[%c0_23, %c0_24, %c0_25, %c0_26], %45 {strides = array<i32>} : memref<1x2x8x8xf32, #tpu.memory_space<vmem>>, vector<1x1x8x8xf32>,
    %46 = arith.truncf %42 : vector<1x8x8xf32> to vector<1x8x8xbf16>
    "tpu.trace_start"() <{level = 10 : i32, message = "bts,bsd->btd"}> : () -> ()
    %cst_27 = arith.constant dense<0.000000e+00> : vector<1x8x128xf32>
    %47 = tpu.matmul %46, %30, %cst_27 {dimension_numbers = #tpu.dot_dimension_numbers<[2], [1], [1], [2], [0, 0, 0, 1, 1, 2], [0], [0]>} : vector<1x8x8xbf16>, vector<1x8x128xbf16>, vector<1x8x128xf32> -> vector<1x8x128xf32>
    "tpu.trace_stop"() : () -> ()
    %48 = vector.shape_cast %47 : vector<1x8x128xf32> to vector<8x128xf32>
    %49 = arith.truncf %48 : vector<8x128xf32> to vector<8x128xbf16>
    %c0_28 = arith.constant 0 : index
    %c0_29 = arith.constant 0 : index
    %50 = vector.load %arg8[%c0_28, %c0_29] : memref<256x128xbf16, #tpu.memory_space<vmem>>, vector<128x128xbf16>
    %cst_30 = arith.constant dense<0.000000e+00> : vector<8x128xf32>
    %51 = tpu.matmul %49, %50, %cst_30 {dimension_numbers = #tpu.dot_dimension_numbers<[1], [0], [0], [1], [0, 0, 1, 1], [], []>} : vector<8x128xbf16>, vector<128x128xbf16>, vector<8x128xf32> -> vector<8x128xf32>
    %52 = arith.addf %27, %51 : vector<8x128xf32>
    %53 = vector.extract_strided_slice %19 {offsets = [0, 0, 128], sizes = [1, 8, 128], strides = [1, 1, 1]} : vector<1x8x256xbf16> to vector<1x8x128xbf16>
    %54 = vector.extract_strided_slice %21 {offsets = [0, 0, 128], sizes = [1, 8, 128], strides = [1, 1, 1]} : vector<1x8x256xbf16> to vector<1x8x128xbf16>
    %55 = vector.extract_strided_slice %23 {offsets = [0, 0, 128], sizes = [1, 8, 128], strides = [1, 1, 1]} : vector<1x8x256xbf16> to vector<1x8x128xbf16>
    "tpu.trace_start"() <{level = 10 : i32, message = "btd,bsd->bts"}> : () -> ()
    %cst_31 = arith.constant dense<0.000000e+00> : vector<1x8x8xf32>
    %56 = tpu.matmul %53, %54, %cst_31 {dimension_numbers = #tpu.dot_dimension_numbers<[2], [2], [1], [1], [0, 0, 0, 1, 1, 1], [0], [0]>} : vector<1x8x128xbf16>, vector<1x8x128xbf16>, vector<1x8x8xf32> -> vector<1x8x8xf32>
    "tpu.trace_stop"() : () -> ()
    %cst_32 = arith.constant 0.176776692 : f32
    %57 = vector.broadcast %cst_32 : f32 to vector<1x8x8xf32>
    %58 = arith.mulf %56, %57 : vector<1x8x8xf32>
    %cst_33 = arith.constant dense<0xFF800000> : vector<1x8xf32>
    %59 = vector.multi_reduction <maximumf>, %58, %cst_33 [2] : vector<1x8x8xf32> to vector<1x8xf32>
    %60 = vector.shape_cast %59 : vector<1x8xf32> to vector<1x8x1xf32>
    %61 = vector.broadcast %60 : vector<1x8x1xf32> to vector<1x8x8xf32>
    %62 = arith.subf %58, %61 : vector<1x8x8xf32>
    %63 = math.exp %62 : vector<1x8x8xf32>
    %cst_34 = arith.constant dense<0.000000e+00> : vector<1x8xf32>
    %64 = vector.multi_reduction <add>, %63, %cst_34 [2] : vector<1x8x8xf32> to vector<1x8xf32>
    %65 = vector.shape_cast %64 : vector<1x8xf32> to vector<1x8x1xf32>
    %66 = vector.broadcast %65 : vector<1x8x1xf32> to vector<1x8x8xf32>
    %67 = arith.divf %63, %66 : vector<1x8x8xf32>
    %c0_35 = arith.constant 0 : index
    %c1 = arith.constant 1 : index
    %c0_36 = arith.constant 0 : index
    %c0_37 = arith.constant 0 : index
    %68 = vector.load %arg19[%c0_35, %c1, %c0_36, %c0_37] : memref<1x2x8x8xf32, #tpu.memory_space<vmem>>, vector<1x1x8x8xf32>
    %69 = vector.shape_cast %68 : vector<1x1x8x8xf32> to vector<1x8x8xf32>
    %70 = vector.shape_cast %67 : vector<1x8x8xf32> to vector<1x1x8x8xf32>
    tpu.vector_store %arg19[%c0_35, %c1, %c0_36, %c0_37], %70 {strides = array<i32>} : memref<1x2x8x8xf32, #tpu.memory_space<vmem>>, vector<1x1x8x8xf32>,
    %71 = arith.truncf %67 : vector<1x8x8xf32> to vector<1x8x8xbf16>
    "tpu.trace_start"() <{level = 10 : i32, message = "bts,bsd->btd"}> : () -> ()
    %cst_38 = arith.constant dense<0.000000e+00> : vector<1x8x128xf32>
    %72 = tpu.matmul %71, %55, %cst_38 {dimension_numbers = #tpu.dot_dimension_numbers<[2], [1], [1], [2], [0, 0, 0, 1, 1, 2], [0], [0]>} : vector<1x8x8xbf16>, vector<1x8x128xbf16>, vector<1x8x128xf32> -> vector<1x8x128xf32>
    "tpu.trace_stop"() : () -> ()
    %73 = vector.shape_cast %72 : vector<1x8x128xf32> to vector<8x128xf32>
    %74 = arith.truncf %73 : vector<8x128xf32> to vector<8x128xbf16>
    %c128 = arith.constant 128 : index
    %c0_39 = arith.constant 0 : index
    %75 = vector.load %arg8[%c128, %c0_39] : memref<256x128xbf16, #tpu.memory_space<vmem>>, vector<128x128xbf16>
    %cst_40 = arith.constant dense<0.000000e+00> : vector<8x128xf32>
    %76 = tpu.matmul %74, %75, %cst_40 {dimension_numbers = #tpu.dot_dimension_numbers<[1], [0], [0], [1], [0, 0, 1, 1], [], []>} : vector<8x128xbf16>, vector<128x128xbf16>, vector<8x128xf32> -> vector<8x128xf32>
    %77 = arith.addf %52, %76 : vector<8x128xf32>
    %78 = arith.addf %1, %77 : vector<8x128xf32>
    %c0_41 = arith.constant 0 : index
    %c0_42 = arith.constant 0 : index
    %79 = vector.load %arg10[%c0_41, %c0_42] : memref<1x128xf32, #tpu.memory_space<vmem>>, vector<1x128xf32>
    %c0_43 = arith.constant 0 : index
    %c0_44 = arith.constant 0 : index
    %80 = vector.load %arg11[%c0_43, %c0_44] : memref<1x128xf32, #tpu.memory_space<vmem>>, vector<1x128xf32>
    %cst_45 = arith.constant dense<0.000000e+00> : vector<8xf32>
    %81 = vector.multi_reduction <add>, %78, %cst_45 [1] : vector<8x128xf32> to vector<8xf32>
    %82 = vector.shape_cast %81 : vector<8xf32> to vector<8x1xf32>
    %cst_46 = arith.constant 3.125000e-02 : f32
    %83 = vector.broadcast %cst_46 : f32 to vector<8x1xf32>
    %84 = arith.mulf %82, %83 : vector<8x1xf32>
    %85 = arith.mulf %78, %78 : vector<8x128xf32>
    %cst_47 = arith.constant dense<0.000000e+00> : vector<8xf32>
    %86 = vector.multi_reduction <add>, %85, %cst_47 [1] : vector<8x128xf32> to vector<8xf32>
    %87 = vector.shape_cast %86 : vector<8xf32> to vector<8x1xf32>
    %cst_48 = arith.constant 3.125000e-02 : f32
    %88 = vector.broadcast %cst_48 : f32 to vector<8x1xf32>
    %89 = arith.mulf %87, %88 : vector<8x1xf32>
    %90 = arith.mulf %84, %84 : vector<8x1xf32>
    %91 = arith.subf %89, %90 : vector<8x1xf32>
    %92 = vector.broadcast %84 : vector<8x1xf32> to vector<8x128xf32>
    %93 = arith.subf %78, %92 : vector<8x128xf32>
    %cst_49 = arith.constant 9.99999974E-6 : f32
    %94 = vector.broadcast %cst_49 : f32 to vector<8x1xf32>
    %95 = arith.addf %91, %94 : vector<8x1xf32>
    %96 = math.rsqrt %95 : vector<8x1xf32>
    %97 = vector.broadcast %96 : vector<8x1xf32> to vector<8x128xf32>
    %98 = arith.mulf %93, %97 : vector<8x128xf32>
    %99 = vector.broadcast %79 : vector<1x128xf32> to vector<8x128xf32>
    %100 = arith.mulf %98, %99 : vector<8x128xf32>
    %101 = vector.broadcast %80 : vector<1x128xf32> to vector<8x128xf32>
    %102 = arith.addf %100, %101 : vector<8x128xf32>
    %103 = arith.truncf %102 : vector<8x128xf32> to vector<8x128xbf16>
    %c0_50 = arith.constant 0 : index
    %c0_51 = arith.constant 0 : index
    %104 = vector.load %arg12[%c0_50, %c0_51] : memref<128x128xbf16, #tpu.memory_space<vmem>>, vector<128x128xbf16>
    %cst_52 = arith.constant dense<0.000000e+00> : vector<8x128xf32>
    %105 = tpu.matmul %103, %104, %cst_52 {dimension_numbers = #tpu.dot_dimension_numbers<[1], [0], [0], [1], [0, 0, 1, 1], [], []>} : vector<8x128xbf16>, vector<128x128xbf16>, vector<8x128xf32> -> vector<8x128xf32>
    %c0_53 = arith.constant 0 : index
    %c0_54 = arith.constant 0 : index
    %106 = vector.load %arg13[%c0_53, %c0_54] : memref<1x128xf32, #tpu.memory_space<vmem>>, vector<1x128xf32>
    %107 = vector.broadcast %106 : vector<1x128xf32> to vector<8x128xf32>
    %108 = arith.addf %105, %107 : vector<8x128xf32>
    %cst_55 = arith.constant 0.000000e+00 : f32
    %109 = vector.broadcast %cst_55 : f32 to vector<8x128xf32>
    %110 = arith.maximumf %108, %109 : vector<8x128xf32>
    %111 = arith.truncf %110 : vector<8x128xf32> to vector<8x128xbf16>
    %c0_56 = arith.constant 0 : index
    %c0_57 = arith.constant 0 : index
    %112 = vector.load %arg14[%c0_56, %c0_57] : memref<128x128xbf16, #tpu.memory_space<vmem>>, vector<128x128xbf16>
    %cst_58 = arith.constant dense<0.000000e+00> : vector<8x128xf32>
    %113 = tpu.matmul %111, %112, %cst_58 {dimension_numbers = #tpu.dot_dimension_numbers<[1], [0], [0], [1], [0, 0, 1, 1], [], []>} : vector<8x128xbf16>, vector<128x128xbf16>, vector<8x128xf32> -> vector<8x128xf32>
    %c0_59 = arith.constant 0 : index
    %c0_60 = arith.constant 0 : index
    %114 = vector.load %arg15[%c0_59, %c0_60] : memref<1x128xf32, #tpu.memory_space<vmem>>, vector<1x128xf32>
    %115 = vector.broadcast %114 : vector<1x128xf32> to vector<8x128xf32>
    %116 = arith.addf %113, %115 : vector<8x128xf32>
    %117 = arith.addf %102, %116 : vector<8x128xf32>
    %c0_61 = arith.constant 0 : index
    %c0_62 = arith.constant 0 : index
    %118 = vector.load %arg16[%c0_61, %c0_62] : memref<1x128xf32, #tpu.memory_space<vmem>>, vector<1x128xf32>
    %c0_63 = arith.constant 0 : index
    %c0_64 = arith.constant 0 : index
    %119 = vector.load %arg17[%c0_63, %c0_64] : memref<1x128xf32, #tpu.memory_space<vmem>>, vector<1x128xf32>
    %cst_65 = arith.constant dense<0.000000e+00> : vector<8xf32>
    %120 = vector.multi_reduction <add>, %117, %cst_65 [1] : vector<8x128xf32> to vector<8xf32>
    %121 = vector.shape_cast %120 : vector<8xf32> to vector<8x1xf32>
    %cst_66 = arith.constant 3.125000e-02 : f32
    %122 = vector.broadcast %cst_66 : f32 to vector<8x1xf32>
    %123 = arith.mulf %121, %122 : vector<8x1xf32>
    %124 = arith.mulf %117, %117 : vector<8x128xf32>
    %cst_67 = arith.constant dense<0.000000e+00> : vector<8xf32>
    %125 = vector.multi_reduction <add>, %124, %cst_67 [1] : vector<8x128xf32> to vector<8xf32>
    %126 = vector.shape_cast %125 : vector<8xf32> to vector<8x1xf32>
    %cst_68 = arith.constant 3.125000e-02 : f32
    %127 = vector.broadcast %cst_68 : f32 to vector<8x1xf32>
    %128 = arith.mulf %126, %127 : vector<8x1xf32>
    %129 = arith.mulf %123, %123 : vector<8x1xf32>
    %130 = arith.subf %128, %129 : vector<8x1xf32>
    %131 = vector.broadcast %123 : vector<8x1xf32> to vector<8x128xf32>
    %132 = arith.subf %117, %131 : vector<8x128xf32>
    %cst_69 = arith.constant 9.99999974E-6 : f32
    %133 = vector.broadcast %cst_69 : f32 to vector<8x1xf32>
    %134 = arith.addf %130, %133 : vector<8x1xf32>
    %135 = math.rsqrt %134 : vector<8x1xf32>
    %136 = vector.broadcast %135 : vector<8x1xf32> to vector<8x128xf32>
    %137 = arith.mulf %132, %136 : vector<8x128xf32>
    %138 = vector.broadcast %118 : vector<1x128xf32> to vector<8x128xf32>
    %139 = arith.mulf %137, %138 : vector<8x128xf32>
    %140 = vector.broadcast %119 : vector<1x128xf32> to vector<8x128xf32>
    %141 = arith.addf %139, %140 : vector<8x128xf32>
    %142 = vector.shape_cast %141 : vector<8x128xf32> to vector<1x8x128xf32>
    %c0_70 = arith.constant 0 : index
    %c0_71 = arith.constant 0 : index
    %c0_72 = arith.constant 0 : index
    %143 = vector.load %arg18[%c0_70, %c0_71, %c0_72] : memref<1x8x128xf32, #tpu.memory_space<vmem>>, vector<1x8x128xf32>
    tpu.vector_store %arg18[%c0_70, %c0_71, %c0_72], %142 {strides = array<i32>} : memref<1x8x128xf32, #tpu.memory_space<vmem>>, vector<1x8x128xf32>,
    return
  }
  func.func @transform_0(%arg0: i32) -> (i32, i32, i32) {
    %c0_i32 = arith.constant 0 : i32
    %c0_i32_0 = arith.constant 0 : i32
    %c0_i32_1 = arith.constant 0 : i32
    return %arg0, %c0_i32, %c0_i32_0 : i32, i32, i32
  }
  func.func @transform_1(%arg0: i32) -> (i32, i32) {
    %c0_i32 = arith.constant 0 : i32
    %c0_i32_0 = arith.constant 0 : i32
    %c0_i32_1 = arith.constant 0 : i32
    return %c0_i32, %c0_i32_0 : i32, i32
  }
  func.func @transform_2(%arg0: i32) -> (i32, i32) {
    %c0_i32 = arith.constant 0 : i32
    %c0_i32_0 = arith.constant 0 : i32
    %c0_i32_1 = arith.constant 0 : i32
    return %c0_i32, %c0_i32_0 : i32, i32
  }
  func.func @transform_3(%arg0: i32) -> (i32, i32) {
    %c0_i32 = arith.constant 0 : i32
    %c0_i32_0 = arith.constant 0 : i32
    %c0_i32_1 = arith.constant 0 : i32
    return %c0_i32, %c0_i32_0 : i32, i32
  }
  func.func @transform_4(%arg0: i32) -> (i32, i32) {
    %c0_i32 = arith.constant 0 : i32
    %c0_i32_0 = arith.constant 0 : i32
    %c0_i32_1 = arith.constant 0 : i32
    return %c0_i32, %c0_i32_0 : i32, i32
  }
  func.func @transform_5(%arg0: i32) -> (i32, i32) {
    %c0_i32 = arith.constant 0 : i32
    %c0_i32_0 = arith.constant 0 : i32
    %c0_i32_1 = arith.constant 0 : i32
    return %c0_i32, %c0_i32_0 : i32, i32
  }
  func.func @transform_6(%arg0: i32) -> (i32, i32) {
    %c0_i32 = arith.constant 0 : i32
    %c0_i32_0 = arith.constant 0 : i32
    %c0_i32_1 = arith.constant 0 : i32
    return %c0_i32, %c0_i32_0 : i32, i32
  }
  func.func @transform_7(%arg0: i32) -> (i32, i32) {
    %c0_i32 = arith.constant 0 : i32
    %c0_i32_0 = arith.constant 0 : i32
    %c0_i32_1 = arith.constant 0 : i32
    return %c0_i32, %c0_i32_0 : i32, i32
  }
  func.func @transform_8(%arg0: i32) -> (i32, i32) {
    %c0_i32 = arith.constant 0 : i32
    %c0_i32_0 = arith.constant 0 : i32
    %c0_i32_1 = arith.constant 0 : i32
    return %c0_i32, %c0_i32_0 : i32, i32
  }
  func.func @transform_9(%arg0: i32) -> (i32, i32) {
    %c0_i32 = arith.constant 0 : i32
    %c0_i32_0 = arith.constant 0 : i32
    %c0_i32_1 = arith.constant 0 : i32
    return %c0_i32, %c0_i32_0 : i32, i32
  }
  func.func @transform_10(%arg0: i32) -> (i32, i32) {
    %c0_i32 = arith.constant 0 : i32
    %c0_i32_0 = arith.constant 0 : i32
    %c0_i32_1 = arith.constant 0 : i32
    return %c0_i32, %c0_i32_0 : i32, i32
  }
  func.func @transform_11(%arg0: i32) -> (i32, i32) {
    %c0_i32 = arith.constant 0 : i32
    %c0_i32_0 = arith.constant 0 : i32
    %c0_i32_1 = arith.constant 0 : i32
    return %c0_i32, %c0_i32_0 : i32, i32
  }
  func.func @transform_12(%arg0: i32) -> (i32, i32) {
    %c0_i32 = arith.constant 0 : i32
    %c0_i32_0 = arith.constant 0 : i32
    %c0_i32_1 = arith.constant 0 : i32
    return %c0_i32, %c0_i32_0 : i32, i32
  }
  func.func @transform_13(%arg0: i32) -> (i32, i32) {
    %c0_i32 = arith.constant 0 : i32
    %c0_i32_0 = arith.constant 0 : i32
    %c0_i32_1 = arith.constant 0 : i32
    return %c0_i32, %c0_i32_0 : i32, i32
  }
  func.func @transform_14(%arg0: i32) -> (i32, i32) {
    %c0_i32 = arith.constant 0 : i32
    %c0_i32_0 = arith.constant 0 : i32
    %c0_i32_1 = arith.constant 0 : i32
    return %c0_i32, %c0_i32_0 : i32, i32
  }
  func.func @transform_15(%arg0: i32) -> (i32, i32) {
    %c0_i32 = arith.constant 0 : i32
    %c0_i32_0 = arith.constant 0 : i32
    %c0_i32_1 = arith.constant 0 : i32
    return %c0_i32, %c0_i32_0 : i32, i32
  }
  func.func @transform_16(%arg0: i32) -> (i32, i32) {
    %c0_i32 = arith.constant 0 : i32
    %c0_i32_0 = arith.constant 0 : i32
    %c0_i32_1 = arith.constant 0 : i32
    return %c0_i32, %c0_i32_0 : i32, i32
  }
  func.func @transform_17(%arg0: i32) -> (i32, i32, i32) {
    %c0_i32 = arith.constant 0 : i32
    %c0_i32_0 = arith.constant 0 : i32
    %c0_i32_1 = arith.constant 0 : i32
    return %arg0, %c0_i32, %c0_i32_0 : i32, i32, i32
  }
  func.func @transform_18(%arg0: i32) -> (i32, i32, i32, i32) {
    %c0_i32 = arith.constant 0 : i32
    %c0_i32_0 = arith.constant 0 : i32
    %c0_i32_1 = arith.constant 0 : i32
    %c0_i32_2 = arith.constant 0 : i32
    return %arg0, %c0_i32, %c0_i32_0, %c0_i32_1 : i32, i32, i32, i32
  }
}

</mosaic_0001>

<llo_original>
// kernel: tpu_custom_call.1
$region0: #{tpu_custom_call.1}
  #allocation0 [shape = 'u32[]', space=smem, size = 0x4, offset = 0x4, fixed_abs, tag = 'smem constant byte address 0x4 - core index']
  #allocation1 [shape = 'u32[144,128]{1,0:T(1,128)}', space=vmem, size = 0x12000, scoped, tag = 'internal scratch']
  %s0 = inlined_call_operand.hbm [shape: f32[2,8,128], index: 0, kind: input, shape index: {}]
  %s1 = inlined_call_operand.hbm [shape: bf16[128,256], index: 1, kind: input, shape index: {}]
  %s2 = inlined_call_operand.hbm [shape: f32[1,256], index: 2, kind: input, shape index: {}]
  %s3 = inlined_call_operand.hbm [shape: bf16[128,256], index: 3, kind: input, shape index: {}]
  %s4 = inlined_call_operand.hbm [shape: f32[1,256], index: 4, kind: input, shape index: {}]
  %s5 = inlined_call_operand.hbm [shape: bf16[128,256], index: 5, kind: input, shape index: {}]
  %s6 = inlined_call_operand.hbm [shape: f32[1,256], index: 6, kind: input, shape index: {}]
  %s7 = inlined_call_operand.hbm [shape: bf16[256,128], index: 7, kind: input, shape index: {}]
  %s8 = inlined_call_operand.hbm [shape: f32[1,128], index: 8, kind: input, shape index: {}]
  %s9 = inlined_call_operand.hbm [shape: f32[1,128], index: 9, kind: input, shape index: {}]
  %s10 = inlined_call_operand.hbm [shape: f32[1,128], index: 10, kind: input, shape index: {}]
  %s11 = inlined_call_operand.hbm [shape: bf16[128,128], index: 11, kind: input, shape index: {}]
  %s12 = inlined_call_operand.hbm [shape: f32[1,128], index: 12, kind: input, shape index: {}]
  %s13 = inlined_call_operand.hbm [shape: bf16[128,128], index: 13, kind: input, shape index: {}]
  %s14 = inlined_call_operand.hbm [shape: f32[1,128], index: 14, kind: input, shape index: {}]
  %s15 = inlined_call_operand.hbm [shape: f32[1,128], index: 15, kind: input, shape index: {}]
  %s16 = inlined_call_operand.hbm [shape: f32[1,128], index: 16, kind: input, shape index: {}]
  %s17 = inlined_call_operand.hbm [shape: f32[2,8,128], index: 17, kind: output, shape index: {0}]
  %s18 = inlined_call_operand.hbm [shape: f32[2,2,8,8], index: 18, kind: output, shape index: {1}]
  %19 = xla_tuple %s17, %s18
  %s20 = sld [smem:[#allocation0]]
  $region177: #{tpu_custom_call.1} parent=0
    _
  %s22 = ssub.s32 1, %s20
  %s23 = scalar_select 0, %s22, %s20
  $region1: #{tpu_custom_call.1} parent=0
    #allocation2 [shape = 'u8[8192]{0}', space=vmem, size = 0x2000, scoped, tag = 'input window, operand 0']
    #allocation3 [shape = 's32[2]{0}', space=sflag, size = 0x8, scoped, tag = 'scoped memory for tpu_custom_call.1']
    #allocation4 [shape = 's32[2]{0}', space=sflag, size = 0x8, scoped, tag = 'scoped memory for tpu_custom_call.1']
    #allocation5 [shape = 'u8[65536]{0}', space=vmem, size = 0x10000, scoped, tag = 'input window, operand 1, single buffered']
    #allocation6 [shape = 's32[1]{0}', space=sflag, size = 0x4, scoped, tag = 'scoped memory for tpu_custom_call.1']
    #allocation7 [shape = 'u8[1024]{0}', space=vmem, size = 0x400, scoped, tag = 'input window, operand 2, single buffered']
    #allocation8 [shape = 'u8[65536]{0}', space=vmem, size = 0x10000, scoped, tag = 'input window, operand 3, single buffered']
    #allocation9 [shape = 's32[1]{0}', space=sflag, size = 0x4, scoped, tag = 'scoped memory for tpu_custom_call.1']
    #allocation10 [shape = 'u8[1024]{0}', space=vmem, size = 0x400, scoped, tag = 'input window, operand 4, single buffered']
    #allocation11 [shape = 'u8[65536]{0}', space=vmem, size = 0x10000, scoped, tag = 'input window, operand 5, single buffered']
    #allocation12 [shape = 's32[1]{0}', space=sflag, size = 0x4, scoped, tag = 'scoped memory for tpu_custom_call.1']
    #allocation13 [shape = 'u8[1024]{0}', space=vmem, size = 0x400, scoped, tag = 'input window, operand 6, single buffered']
    #allocation14 [shape = 'u8[65536]{0}', space=vmem, size = 0x10000, scoped, tag = 'input window, operand 7, single buffered']
    #allocation15 [shape = 's32[1]{0}', space=sflag, size = 0x4, scoped, tag = 'scoped memory for tpu_custom_call.1']
    #allocation16 [shape = 'u8[512]{0}', space=vmem, size = 0x400, scoped, tag = 'input window, operand 8, single buffered']
    #allocation17 [shape = 'u8[512]{0}', space=vmem, size = 0x400, scoped, tag = 'input window, operand 9, single buffered']
    #allocation18 [shape = 's32[1]{0}', space=sflag, size = 0x4, scoped, tag = 'scoped memory for tpu_custom_call.1']
    #allocation19 [shape = 'u8[512]{0}', space=vmem, size = 0x400, scoped, tag = 'input window, operand 10, single buffered']
    #allocation20 [shape = 'u8[32768]{0}', space=vmem, size = 0x8000, scoped, tag = 'input window, operand 11, single buffered']
    #allocation21 [shape = 's32[1]{0}', space=sflag, size = 0x4, scoped, tag = 'scoped memory for tpu_custom_call.1']
    #allocation22 [shape = 'u8[512]{0}', space=vmem, size = 0x400, scoped, tag = 'input window, operand 12, single buffered']
    #allocation23 [shape = 'u8[32768]{0}', space=vmem, size = 0x8000, scoped, tag = 'input window, operand 13, single buffered']
    #allocation24 [shape = 's32[1]{0}', space=sflag, size = 0x4, scoped, tag = 'scoped memory for tpu_custom_call.1']
    #allocation25 [shape = 'u8[512]{0}', space=vmem, size = 0x400, scoped, tag = 'input window, operand 14, single buffered']
    #allocation26 [shape = 'u8[512]{0}', space=vmem, size = 0x400, scoped, tag = 'input window, operand 15, single buffered']
    #allocation27 [shape = 's32[1]{0}', space=sflag, size = 0x4, scoped, tag = 'scoped memory for tpu_custom_call.1']
    #allocation28 [shape = 'u8[512]{0}', space=vmem, size = 0x400, scoped, tag = 'input window, operand 16, single buffered']
    #allocation29 [shape = 'u8[8192]{0}', space=vmem, size = 0x2000, scoped, tag = 'output window, operand 0']
    #allocation30 [shape = 'u8[16384]{0}', space=vmem, size = 0x4000, scoped, tag = 'output window, operand 1']
    #allocation31 [shape = 's32[2]{0}', space=sflag, size = 0x8, scoped, tag = 'scoped memory for tpu_custom_call.1']
    %24 = vsyncpa [#allocation3], 0
    %s25 = scalar_lea.sflag [#allocation3], 1
    %26 = vsyncpa %s25, 0
    %27 = vsyncpa [#allocation6], 0
    %28 = vsyncpa [#allocation9], 0
    %29 = vsyncpa [#allocation12], 0
    %30 = vsyncpa [#allocation15], 0
    %31 = vsyncpa [#allocation18], 0
    %32 = vsyncpa [#allocation21], 0
    %33 = vsyncpa [#allocation24], 0
    %34 = vsyncpa [#allocation27], 0
    %35 = vsyncpa [#allocation4], 0
    %s36 = scalar_lea.sflag [#allocation4], 1
    %37 = vsyncpa %s36, 0
    %38 = vsyncpa [#allocation31], 0
    %s39 = scalar_lea.sflag [#allocation31], 1
    %40 = vsyncpa %s39, 0
    loop: start=0, step=1, limit=4
    $region2: #{tpu_custom_call.1} parent=1 // loop_pre_header
      _
    $region3: #{tpu_custom_call.1} parent=1 // loop_header
      %s42 = sphi 0, %s46
      %p43 = scmp.ge.s32.totalorder %s42, 4
      %s52 = sphi 0, %s54
      %s55 = sphi 0, %s52
      %s56 = sphi 0, %s55
      %s72 = sphi 0, %s56
      %s76 = sphi 0, %s76
      %s78 = sphi 0, %s76
      %s79 = sphi 0, %s78
      %s93 = sphi 0, %s79
      %s97 = sphi 0, %s97
      %s99 = sphi 0, %s97
      %s100 = sphi 0, %s99
      %s114 = sphi 0, %s100
      %s118 = sphi 0, %s118
      %s120 = sphi 0, %s118
      %s121 = sphi 0, %s120
      %s135 = sphi 0, %s121
      %s139 = sphi 0, %s139
      %s141 = sphi 0, %s139
      %s142 = sphi 0, %s141
      %s156 = sphi 0, %s142
      %s160 = sphi 0, %s160
      %s162 = sphi 0, %s160
      %s163 = sphi 0, %s162
      %s177 = sphi 0, %s163
      %s181 = sphi 0, %s181
      %s183 = sphi 0, %s181
      %s184 = sphi 0, %s183
      %s198 = sphi 0, %s184
      %s202 = sphi 0, %s202
      %s204 = sphi 0, %s202
      %s205 = sphi 0, %s204
      %s219 = sphi 0, %s205
      %s223 = sphi 0, %s223
      %s225 = sphi 0, %s223
      %s226 = sphi 0, %s225
      %s240 = sphi 0, %s226
      %s244 = sphi 0, %s244
      %s246 = sphi 0, %s244
      %s247 = sphi 0, %s246
      %s261 = sphi 0, %s247
      %s265 = sphi 0, %s265
      %s267 = sphi 0, %s265
      %s268 = sphi 0, %s267
      %s282 = sphi 0, %s268
      %s286 = sphi 0, %s286
      %s288 = sphi 0, %s286
      %s289 = sphi 0, %s288
      %s303 = sphi 0, %s289
      %s307 = sphi 0, %s307
      %s309 = sphi 0, %s307
      %s310 = sphi 0, %s309
      %s324 = sphi 0, %s310
      %s328 = sphi 0, %s328
      %s330 = sphi 0, %s328
      %s331 = sphi 0, %s330
      %s345 = sphi 0, %s331
      %s349 = sphi 0, %s349
      %s351 = sphi 0, %s349
      %s352 = sphi 0, %s351
      %s366 = sphi 0, %s352
      %s370 = sphi 0, %s370
      %s372 = sphi 0, %s370
      %s373 = sphi 0, %s372
      %s387 = sphi 0, %s373
      %s391 = sphi 0, %s391
      %s393 = sphi 0, %s391
      %s394 = sphi 0, %s393
      %s408 = sphi 0, %s394
      %s414 = sphi 0, %s416
      %s417 = sphi 0, %s414
      %s418 = sphi 0, %s417
      %s434 = sphi 0, %s418
      %s440 = sphi 0, %s442
      %s443 = sphi 0, %s440
      %s444 = sphi 0, %s443
      %s460 = sphi 0, %s444
    $region4: #{tpu_custom_call.1} parent=1 // loop_header_branch
      %45 = sbr.rel (%p43) target = $region8
    $region5: #{tpu_custom_call.1} parent=1 // loop_body
      %s47 = ssub.s32 %s42, 1
      %s48 = ssub.s32 %s42, 2
      %s49 = sadd.s32 %s42, 1
      %s50 = ssub.s32 %s42, %s49
      %p51 = scmp.eq.s32.totalorder %s50, 0
      %s53 = sadd.s32 %s52, 1
      %s54 = scalar_select %p51, %s52, %s53
      %p57 = pneg %p51
      %p58 = scmp.eq.s32.totalorder %s42, 1
      %p59 = por %p57, %p58
      %p60 = scmp.ne.s32.totalorder %s52, %s55
      %p61 = scmp.eq.s32.totalorder %s42, 0
      %p62 = por %p60, %p61
      %p63 = scmp.ne.s32.totalorder %s52, %s55
      %p64 = scmp.eq.s32.totalorder %s47, 1
      %p65 = por %p63, %p64
      %p66 = scmp.ne.s32.totalorder %s55, %s56
      %p67 = scmp.eq.s32.totalorder %s47, 0
      %p68 = por %p66, %p67
      %p69 = scmp.ne.s32.totalorder %s55, %s56
      %p70 = scmp.eq.s32.totalorder %s48, 1
      %p71 = por %p69, %p70
      %p73 = scmp.ne.s32.totalorder %s56, %s72
      %p74 = scmp.eq.s32.totalorder %s48, 0
      %p75 = por %p73, %p74
      %s77 = sadd.s32 %s76, 1
      %p80 = scmp.eq.s32.totalorder %s42, 1
      %p81 = scmp.ne.s32.totalorder %s76, %s78
      %p82 = scmp.eq.s32.totalorder %s42, 0
      %p83 = por %p81, %p82
      %p84 = scmp.ne.s32.totalorder %s76, %s78
      %p85 = scmp.eq.s32.totalorder %s47, 1
      %p86 = por %p84, %p85
      %p87 = scmp.ne.s32.totalorder %s78, %s79
      %p88 = scmp.eq.s32.totalorder %s47, 0
      %p89 = por %p87, %p88
      %p90 = scmp.ne.s32.totalorder %s78, %s79
      %p91 = scmp.eq.s32.totalorder %s48, 1
      %p92 = por %p90, %p91
      %p94 = scmp.ne.s32.totalorder %s79, %s93
      %p95 = scmp.eq.s32.totalorder %s48, 0
      %p96 = por %p94, %p95
      %s98 = sadd.s32 %s97, 1
      %p101 = scmp.eq.s32.totalorder %s42, 1
      %p102 = scmp.ne.s32.totalorder %s97, %s99
      %p103 = scmp.eq.s32.totalorder %s42, 0
      %p104 = por %p102, %p103
      %p105 = scmp.ne.s32.totalorder %s97, %s99
      %p106 = scmp.eq.s32.totalorder %s47, 1
      %p107 = por %p105, %p106
      %p108 = scmp.ne.s32.totalorder %s99, %s100
      %p109 = scmp.eq.s32.totalorder %s47, 0
      %p110 = por %p108, %p109
      %p111 = scmp.ne.s32.totalorder %s99, %s100
      %p112 = scmp.eq.s32.totalorder %s48, 1
      %p113 = por %p111, %p112
      %p115 = scmp.ne.s32.totalorder %s100, %s114
      %p116 = scmp.eq.s32.totalorder %s48, 0
      %p117 = por %p115, %p116
      %s119 = sadd.s32 %s118, 1
      %p122 = scmp.eq.s32.totalorder %s42, 1
      %p123 = scmp.ne.s32.totalorder %s118, %s120
      %p124 = scmp.eq.s32.totalorder %s42, 0
      %p125 = por %p123, %p124
      %p126 = scmp.ne.s32.totalorder %s118, %s120
      %p127 = scmp.eq.s32.totalorder %s47, 1
      %p128 = por %p126, %p127
      %p129 = scmp.ne.s32.totalorder %s120, %s121
      %p130 = scmp.eq.s32.totalorder %s47, 0
      %p131 = por %p129, %p130
      %p132 = scmp.ne.s32.totalorder %s120, %s121
      %p133 = scmp.eq.s32.totalorder %s48, 1
      %p134 = por %p132, %p133
      %p136 = scmp.ne.s32.totalorder %s121, %s135
      %p137 = scmp.eq.s32.totalorder %s48, 0
      %p138 = por %p136, %p137
      %s140 = sadd.s32 %s139, 1
      %p143 = scmp.eq.s32.totalorder %s42, 1
      %p144 = scmp.ne.s32.totalorder %s139, %s141
      %p145 = scmp.eq.s32.totalorder %s42, 0
      %p146 = por %p144, %p145
      %p147 = scmp.ne.s32.totalorder %s139, %s141
      %p148 = scmp.eq.s32.totalorder %s47, 1
      %p149 = por %p147, %p148
      %p150 = scmp.ne.s32.totalorder %s141, %s142
      %p151 = scmp.eq.s32.totalorder %s47, 0
      %p152 = por %p150, %p151
      %p153 = scmp.ne.s32.totalorder %s141, %s142
      %p154 = scmp.eq.s32.totalorder %s48, 1
      %p155 = por %p153, %p154
      %p157 = scmp.ne.s32.totalorder %s142, %s156
      %p158 = scmp.eq.s32.totalorder %s48, 0
      %p159 = por %p157, %p158
      %s161 = sadd.s32 %s160, 1
      %p164 = scmp.eq.s32.totalorder %s42, 1
      %p165 = scmp.ne.s32.totalorder %s160, %s162
      %p166 = scmp.eq.s32.totalorder %s42, 0
      %p167 = por %p165, %p166
      %p168 = scmp.ne.s32.totalorder %s160, %s162
      %p169 = scmp.eq.s32.totalorder %s47, 1
      %p170 = por %p168, %p169
      %p171 = scmp.ne.s32.totalorder %s162, %s163
      %p172 = scmp.eq.s32.totalorder %s47, 0
      %p173 = por %p171, %p172
      %p174 = scmp.ne.s32.totalorder %s162, %s163
      %p175 = scmp.eq.s32.totalorder %s48, 1
      %p176 = por %p174, %p175
      %p178 = scmp.ne.s32.totalorder %s163, %s177
      %p179 = scmp.eq.s32.totalorder %s48, 0
      %p180 = por %p178, %p179
      %s182 = sadd.s32 %s181, 1
      %p185 = scmp.eq.s32.totalorder %s42, 1
      %p186 = scmp.ne.s32.totalorder %s181, %s183
      %p187 = scmp.eq.s32.totalorder %s42, 0
      %p188 = por %p186, %p187
      %p189 = scmp.ne.s32.totalorder %s181, %s183
      %p190 = scmp.eq.s32.totalorder %s47, 1
      %p191 = por %p189, %p190
      %p192 = scmp.ne.s32.totalorder %s183, %s184
      %p193 = scmp.eq.s32.totalorder %s47, 0
      %p194 = por %p192, %p193
      %p195 = scmp.ne.s32.totalorder %s183, %s184
      %p196 = scmp.eq.s32.totalorder %s48, 1
      %p197 = por %p195, %p196
      %p199 = scmp.ne.s32.totalorder %s184, %s198
      %p200 = scmp.eq.s32.totalorder %s48, 0
      %p201 = por %p199, %p200
      %s203 = sadd.s32 %s202, 1
      %p206 = scmp.eq.s32.totalorder %s42, 1
      %p207 = scmp.ne.s32.totalorder %s202, %s204
      %p208 = scmp.eq.s32.totalorder %s42, 0
      %p209 = por %p207, %p208
      %p210 = scmp.ne.s32.totalorder %s202, %s204
      %p211 = scmp.eq.s32.totalorder %s47, 1
      %p212 = por %p210, %p211
      %p213 = scmp.ne.s32.totalorder %s204, %s205
      %p214 = scmp.eq.s32.totalorder %s47, 0
      %p215 = por %p213, %p214
      %p216 = scmp.ne.s32.totalorder %s204, %s205
      %p217 = scmp.eq.s32.totalorder %s48, 1
      %p218 = por %p216, %p217
      %p220 = scmp.ne.s32.totalorder %s205, %s219
      %p221 = scmp.eq.s32.totalorder %s48, 0
      %p222 = por %p220, %p221
      %s224 = sadd.s32 %s223, 1
      %p227 = scmp.eq.s32.totalorder %s42, 1
      %p228 = scmp.ne.s32.totalorder %s223, %s225
      %p229 = scmp.eq.s32.totalorder %s42, 0
      %p230 = por %p228, %p229
      %p231 = scmp.ne.s32.totalorder %s223, %s225
      %p232 = scmp.eq.s32.totalorder %s47, 1
      %p233 = por %p231, %p232
      %p234 = scmp.ne.s32.totalorder %s225, %s226
      %p235 = scmp.eq.s32.totalorder %s47, 0
      %p236 = por %p234, %p235
      %p237 = scmp.ne.s32.totalorder %s225, %s226
      %p238 = scmp.eq.s32.totalorder %s48, 1
      %p239 = por %p237, %p238
      %p241 = scmp.ne.s32.totalorder %s226, %s240
      %p242 = scmp.eq.s32.totalorder %s48, 0
      %p243 = por %p241, %p242
      %s245 = sadd.s32 %s244, 1
      %p248 = scmp.eq.s32.totalorder %s42, 1
      %p249 = scmp.ne.s32.totalorder %s244, %s246
      %p250 = scmp.eq.s32.totalorder %s42, 0
      %p251 = por %p249, %p250
      %p252 = scmp.ne.s32.totalorder %s244, %s246
      %p253 = scmp.eq.s32.totalorder %s47, 1
      %p254 = por %p252, %p253
      %p255 = scmp.ne.s32.totalorder %s246, %s247
      %p256 = scmp.eq.s32.totalorder %s47, 0
      %p257 = por %p255, %p256
      %p258 = scmp.ne.s32.totalorder %s246, %s247
      %p259 = scmp.eq.s32.totalorder %s48, 1
      %p260 = por %p258, %p259
      %p262 = scmp.ne.s32.totalorder %s247, %s261
      %p263 = scmp.eq.s32.totalorder %s48, 0
      %p264 = por %p262, %p263
      %s266 = sadd.s32 %s265, 1
      %p269 = scmp.eq.s32.totalorder %s42, 1
      %p270 = scmp.ne.s32.totalorder %s265, %s267
      %p271 = scmp.eq.s32.totalorder %s42, 0
      %p272 = por %p270, %p271
      %p273 = scmp.ne.s32.totalorder %s265, %s267
      %p274 = scmp.eq.s32.totalorder %s47, 1
      %p275 = por %p273, %p274
      %p276 = scmp.ne.s32.totalorder %s267, %s268
      %p277 = scmp.eq.s32.totalorder %s47, 0
      %p278 = por %p276, %p277
      %p279 = scmp.ne.s32.totalorder %s267, %s268
      %p280 = scmp.eq.s32.totalorder %s48, 1
      %p281 = por %p279, %p280
      %p283 = scmp.ne.s32.totalorder %s268, %s282
      %p284 = scmp.eq.s32.totalorder %s48, 0
      %p285 = por %p283, %p284
      %s287 = sadd.s32 %s286, 1
      %p290 = scmp.eq.s32.totalorder %s42, 1
      %p291 = scmp.ne.s32.totalorder %s286, %s288
      %p292 = scmp.eq.s32.totalorder %s42, 0
      %p293 = por %p291, %p292
      %p294 = scmp.ne.s32.totalorder %s286, %s288
      %p295 = scmp.eq.s32.totalorder %s47, 1
      %p296 = por %p294, %p295
      %p297 = scmp.ne.s32.totalorder %s288, %s289
      %p298 = scmp.eq.s32.totalorder %s47, 0
      %p299 = por %p297, %p298
      %p300 = scmp.ne.s32.totalorder %s288, %s289
      %p301 = scmp.eq.s32.totalorder %s48, 1
      %p302 = por %p300, %p301
      %p304 = scmp.ne.s32.totalorder %s289, %s303
      %p305 = scmp.eq.s32.totalorder %s48, 0
      %p306 = por %p304, %p305
      %s308 = sadd.s32 %s307, 1
      %p311 = scmp.eq.s32.totalorder %s42, 1
      %p312 = scmp.ne.s32.totalorder %s307, %s309
      %p313 = scmp.eq.s32.totalorder %s42, 0
      %p314 = por %p312, %p313
      %p315 = scmp.ne.s32.totalorder %s307, %s309
      %p316 = scmp.eq.s32.totalorder %s47, 1
      %p317 = por %p315, %p316
      %p318 = scmp.ne.s32.totalorder %s309, %s310
      %p319 = scmp.eq.s32.totalorder %s47, 0
      %p320 = por %p318, %p319
      %p321 = scmp.ne.s32.totalorder %s309, %s310
      %p322 = scmp.eq.s32.totalorder %s48, 1
      %p323 = por %p321, %p322
      %p325 = scmp.ne.s32.totalorder %s310, %s324
      %p326 = scmp.eq.s32.totalorder %s48, 0
      %p327 = por %p325, %p326
      %s329 = sadd.s32 %s328, 1
      %p332 = scmp.eq.s32.totalorder %s42, 1
      %p333 = scmp.ne.s32.totalorder %s328, %s330
      %p334 = scmp.eq.s32.totalorder %s42, 0
      %p335 = por %p333, %p334
      %p336 = scmp.ne.s32.totalorder %s328, %s330
      %p337 = scmp.eq.s32.totalorder %s47, 1
      %p338 = por %p336, %p337
      %p339 = scmp.ne.s32.totalorder %s330, %s331
      %p340 = scmp.eq.s32.totalorder %s47, 0
      %p341 = por %p339, %p340
      %p342 = scmp.ne.s32.totalorder %s330, %s331
      %p343 = scmp.eq.s32.totalorder %s48, 1
      %p344 = por %p342, %p343
      %p346 = scmp.ne.s32.totalorder %s331, %s345
      %p347 = scmp.eq.s32.totalorder %s48, 0
      %p348 = por %p346, %p347
      %s350 = sadd.s32 %s349, 1
      %p353 = scmp.eq.s32.totalorder %s42, 1
      %p354 = scmp.ne.s32.totalorder %s349, %s351
      %p355 = scmp.eq.s32.totalorder %s42, 0
      %p356 = por %p354, %p355
      %p357 = scmp.ne.s32.totalorder %s349, %s351
      %p358 = scmp.eq.s32.totalorder %s47, 1
      %p359 = por %p357, %p358
      %p360 = scmp.ne.s32.totalorder %s351, %s352
      %p361 = scmp.eq.s32.totalorder %s47, 0
      %p362 = por %p360, %p361
      %p363 = scmp.ne.s32.totalorder %s351, %s352
      %p364 = scmp.eq.s32.totalorder %s48, 1
      %p365 = por %p363, %p364
      %p367 = scmp.ne.s32.totalorder %s352, %s366
      %p368 = scmp.eq.s32.totalorder %s48, 0
      %p369 = por %p367, %p368
      %s371 = sadd.s32 %s370, 1
      %p374 = scmp.eq.s32.totalorder %s42, 1
      %p375 = scmp.ne.s32.totalorder %s370, %s372
      %p376 = scmp.eq.s32.totalorder %s42, 0
      %p377 = por %p375, %p376
      %p378 = scmp.ne.s32.totalorder %s370, %s372
      %p379 = scmp.eq.s32.totalorder %s47, 1
      %p380 = por %p378, %p379
      %p381 = scmp.ne.s32.totalorder %s372, %s373
      %p382 = scmp.eq.s32.totalorder %s47, 0
      %p383 = por %p381, %p382
      %p384 = scmp.ne.s32.totalorder %s372, %s373
      %p385 = scmp.eq.s32.totalorder %s48, 1
      %p386 = por %p384, %p385
      %p388 = scmp.ne.s32.totalorder %s373, %s387
      %p389 = scmp.eq.s32.totalorder %s48, 0
      %p390 = por %p388, %p389
      %s392 = sadd.s32 %s391, 1
      %p395 = scmp.eq.s32.totalorder %s42, 1
      %p396 = scmp.ne.s32.totalorder %s391, %s393
      %p397 = scmp.eq.s32.totalorder %s42, 0
      %p398 = por %p396, %p397
      %p399 = scmp.ne.s32.totalorder %s391, %s393
      %p400 = scmp.eq.s32.totalorder %s47, 1
      %p401 = por %p399, %p400
      %p402 = scmp.ne.s32.totalorder %s393, %s394
      %p403 = scmp.eq.s32.totalorder %s47, 0
      %p404 = por %p402, %p403
      %p405 = scmp.ne.s32.totalorder %s393, %s394
      %p406 = scmp.eq.s32.totalorder %s48, 1
      %p407 = por %p405, %p406
      %p409 = scmp.ne.s32.totalorder %s394, %s408
      %p410 = scmp.eq.s32.totalorder %s48, 0
      %p411 = por %p409, %p410
      %s412 = ssub.s32 %s42, %s49
      %p413 = scmp.eq.s32.totalorder %s412, 0
      %s415 = sadd.s32 %s414, 1
      %s416 = scalar_select %p413, %s414, %s415
      %p419 = pneg %p413
      %p420 = scmp.eq.s32.totalorder %s42, 1
      %p421 = por %p419, %p420
      %p422 = scmp.ne.s32.totalorder %s414, %s417
      %p423 = scmp.eq.s32.totalorder %s42, 0
      %p424 = por %p422, %p423
      %p425 = scmp.ne.s32.totalorder %s414, %s417
      %p426 = scmp.eq.s32.totalorder %s47, 1
      %p427 = por %p425, %p426
      %p428 = scmp.ne.s32.totalorder %s417, %s418
      %p429 = scmp.eq.s32.totalorder %s47, 0
      %p430 = por %p428, %p429
      %p431 = scmp.ne.s32.totalorder %s417, %s418
      %p432 = scmp.eq.s32.totalorder %s48, 1
      %p433 = por %p431, %p432
      %p435 = scmp.ne.s32.totalorder %s418, %s434
      %p436 = scmp.eq.s32.totalorder %s48, 0
      %p437 = por %p435, %p436
      %s438 = ssub.s32 %s42, %s49
      %p439 = scmp.eq.s32.totalorder %s438, 0
      %s441 = sadd.s32 %s440, 1
      %s442 = scalar_select %p439, %s440, %s441
      %p445 = pneg %p439
      %p446 = scmp.eq.s32.totalorder %s42, 1
      %p447 = por %p445, %p446
      %p448 = scmp.ne.s32.totalorder %s440, %s443
      %p449 = scmp.eq.s32.totalorder %s42, 0
      %p450 = por %p448, %p449
      %p451 = scmp.ne.s32.totalorder %s440, %s443
      %p452 = scmp.eq.s32.totalorder %s47, 1
      %p453 = por %p451, %p452
      %p454 = scmp.ne.s32.totalorder %s443, %s444
      %p455 = scmp.eq.s32.totalorder %s47, 0
      %p456 = por %p454, %p455
      %p457 = scmp.ne.s32.totalorder %s443, %s444
      %p458 = scmp.eq.s32.totalorder %s48, 1
      %p459 = por %p457, %p458
      %p461 = scmp.ne.s32.totalorder %s444, %s460
      %p462 = scmp.eq.s32.totalorder %s48, 0
      %p463 = por %p461, %p462
      %p464 = scmp.le.s32.totalorder 1, %s42
      %p465 = scmp.lt.s32.totalorder %s42, 3
      %p466 = pnand %p464, %p465
      %p467 = pneg %p466
      // Predicated region
      $region9: #{tpu_custom_call.1} parent=5 // pred_check
        _
      $region10: #{tpu_custom_call.1} parent=5 // pred_check_branch
        %469 = sbr.rel (%p466) target = $region12
      $region11: #{tpu_custom_call.1} parent=5 // pred_region
        %s470 = ssub.s32 %s42, 1
        // Predicated region
        $region13: #{tpu_custom_call.1} parent=11 // pred_check
          %p471 = pneg %p89
        $region14: #{tpu_custom_call.1} parent=11 // pred_check_branch
          %473 = sbr.rel (%p471) target = $region16
        $region15: #{tpu_custom_call.1} parent=11 // pred_region
          %s475 = ssub.s32 2048, 2048
          %476 = vsyncadd [#allocation6], %s475
          %s477 = sshll.u32 [#allocation5], 4
          %s478 = int_to_ptr.vmem [resolvable:$true] %s477
          %483 = dma.hbm_to_vmem [thread:$0]  %s1, 2048, %s478, [#allocation6], 128, 128, 8
        $region16: #{tpu_custom_call.1} parent=11 // pred_fallthru
          _
        // Predicated region
        $region17: #{tpu_custom_call.1} parent=11 // pred_check
          %p484 = pneg %p110
        $region18: #{tpu_custom_call.1} parent=11 // pred_check_branch
          %486 = sbr.rel (%p484) target = $region20
        $region19: #{tpu_custom_call.1} parent=11 // pred_region
          %s488 = ssub.s32 32, 32
          %489 = vsyncadd [#allocation6], %s488
          %s491 = sshll.u32 [#allocation7], 4
          %s492 = int_to_ptr.vmem [resolvable:$true] %s491
          %494 = dma.hbm_to_vmem [thread:$0]  %s2, 32, %s492, [#allocation6]
        $region20: #{tpu_custom_call.1} parent=11 // pred_fallthru
          _
        // Predicated region
        $region21: #{tpu_custom_call.1} parent=11 // pred_check
          %p495 = pneg %p131
        $region22: #{tpu_custom_call.1} parent=11 // pred_check_branch
          %497 = sbr.rel (%p495) target = $region24
        $region23: #{tpu_custom_call.1} parent=11 // pred_region
          %s499 = ssub.s32 2048, 2048
          %500 = vsyncadd [#allocation9], %s499
          %s501 = sshll.u32 [#allocation8], 4
          %s502 = int_to_ptr.vmem [resolvable:$true] %s501
          %507 = dma.hbm_to_vmem [thread:$0]  %s3, 2048, %s502, [#allocation9], 128, 128, 8
        $region24: #{tpu_custom_call.1} parent=11 // pred_fallthru
          _
        // Predicated region
        $region25: #{tpu_custom_call.1} parent=11 // pred_check
          %p508 = pneg %p152
        $region26: #{tpu_custom_call.1} parent=11 // pred_check_branch
          %510 = sbr.rel (%p508) target = $region28
        $region27: #{tpu_custom_call.1} parent=11 // pred_region
          %s512 = ssub.s32 32, 32
          %513 = vsyncadd [#allocation9], %s512
          %s515 = sshll.u32 [#allocation10], 4
          %s516 = int_to_ptr.vmem [resolvable:$true] %s515
          %518 = dma.hbm_to_vmem [thread:$0]  %s4, 32, %s516, [#allocation9]
        $region28: #{tpu_custom_call.1} parent=11 // pred_fallthru
          _
        // Predicated region
        $region29: #{tpu_custom_call.1} parent=11 // pred_check
          %p519 = pneg %p173
        $region30: #{tpu_custom_call.1} parent=11 // pred_check_branch
          %521 = sbr.rel (%p519) target = $region32
        $region31: #{tpu_custom_call.1} parent=11 // pred_region
          %s523 = ssub.s32 2048, 2048
          %524 = vsyncadd [#allocation12], %s523
          %s525 = sshll.u32 [#allocation11], 4
          %s526 = int_to_ptr.vmem [resolvable:$true] %s525
          %531 = dma.hbm_to_vmem [thread:$0]  %s5, 2048, %s526, [#allocation12], 128, 128, 8
        $region32: #{tpu_custom_call.1} parent=11 // pred_fallthru
          _
        // Predicated region
        $region33: #{tpu_custom_call.1} parent=11 // pred_check
          %p532 = pneg %p194
        $region34: #{tpu_custom_call.1} parent=11 // pred_check_branch
          %534 = sbr.rel (%p532) target = $region36
        $region35: #{tpu_custom_call.1} parent=11 // pred_region
          %s536 = ssub.s32 32, 32
          %537 = vsyncadd [#allocation12], %s536
          %s539 = sshll.u32 [#allocation13], 4
          %s540 = int_to_ptr.vmem [resolvable:$true] %s539
          %542 = dma.hbm_to_vmem [thread:$0]  %s6, 32, %s540, [#allocation12]
        $region36: #{tpu_custom_call.1} parent=11 // pred_fallthru
          _
        // Predicated region
        $region37: #{tpu_custom_call.1} parent=11 // pred_check
          %p543 = pneg %p215
        $region38: #{tpu_custom_call.1} parent=11 // pred_check_branch
          %545 = sbr.rel (%p543) target = $region40
        $region39: #{tpu_custom_call.1} parent=11 // pred_region
          %s547 = ssub.s32 2048, 2048
          %548 = vsyncadd [#allocation15], %s547
          %s549 = sshll.u32 [#allocation14], 4
          %s550 = int_to_ptr.vmem [resolvable:$true] %s549
          %555 = dma.hbm_to_vmem [thread:$0]  %s7, 2048, %s550, [#allocation15], 64, 64, 4
        $region40: #{tpu_custom_call.1} parent=11 // pred_fallthru
          _
        // Predicated region
        $region41: #{tpu_custom_call.1} parent=11 // pred_check
          %p556 = pneg %p236
        $region42: #{tpu_custom_call.1} parent=11 // pred_check_branch
          %558 = sbr.rel (%p556) target = $region44
        $region43: #{tpu_custom_call.1} parent=11 // pred_region
          %s560 = ssub.s32 16, 16
          %561 = vsyncadd [#allocation15], %s560
          %s563 = sshll.u32 [#allocation16], 4
          %s564 = int_to_ptr.vmem [resolvable:$true] %s563
          %566 = dma.hbm_to_vmem [thread:$0]  %s8, 16, %s564, [#allocation15]
        $region44: #{tpu_custom_call.1} parent=11 // pred_fallthru
          _
        // Predicated region
        $region45: #{tpu_custom_call.1} parent=11 // pred_check
          %p567 = pneg %p257
        $region46: #{tpu_custom_call.1} parent=11 // pred_check_branch
          %569 = sbr.rel (%p567) target = $region48
        $region47: #{tpu_custom_call.1} parent=11 // pred_region
          %s571 = ssub.s32 16, 16
          %572 = vsyncadd [#allocation18], %s571
          %s574 = sshll.u32 [#allocation17], 4
          %s575 = int_to_ptr.vmem [resolvable:$true] %s574
          %577 = dma.hbm_to_vmem [thread:$0]  %s9, 16, %s575, [#allocation18]
        $region48: #{tpu_custom_call.1} parent=11 // pred_fallthru
          _
        // Predicated region
        $region49: #{tpu_custom_call.1} parent=11 // pred_check
          %p578 = pneg %p278
        $region50: #{tpu_custom_call.1} parent=11 // pred_check_branch
          %580 = sbr.rel (%p578) target = $region52
        $region51: #{tpu_custom_call.1} parent=11 // pred_region
          %s582 = ssub.s32 16, 16
          %583 = vsyncadd [#allocation18], %s582
          %s585 = sshll.u32 [#allocation19], 4
          %s586 = int_to_ptr.vmem [resolvable:$true] %s585
          %588 = dma.hbm_to_vmem [thread:$0]  %s10, 16, %s586, [#allocation18]
        $region52: #{tpu_custom_call.1} parent=11 // pred_fallthru
          _
        // Predicated region
        $region53: #{tpu_custom_call.1} parent=11 // pred_check
          %p589 = pneg %p299
        $region54: #{tpu_custom_call.1} parent=11 // pred_check_branch
          %591 = sbr.rel (%p589) target = $region56
        $region55: #{tpu_custom_call.1} parent=11 // pred_region
          %s593 = ssub.s32 1024, 1024
          %594 = vsyncadd [#allocation21], %s593
          %s595 = sshll.u32 [#allocation20], 4
          %s596 = int_to_ptr.vmem [resolvable:$true] %s595
          %601 = dma.hbm_to_vmem [thread:$0]  %s11, 1024, %s596, [#allocation21], 64, 64, 4
        $region56: #{tpu_custom_call.1} parent=11 // pred_fallthru
          _
        // Predicated region
        $region57: #{tpu_custom_call.1} parent=11 // pred_check
          %p602 = pneg %p320
        $region58: #{tpu_custom_call.1} parent=11 // pred_check_branch
          %604 = sbr.rel (%p602) target = $region60
        $region59: #{tpu_custom_call.1} parent=11 // pred_region
          %s606 = ssub.s32 16, 16
          %607 = vsyncadd [#allocation21], %s606
          %s609 = sshll.u32 [#allocation22], 4
          %s610 = int_to_ptr.vmem [resolvable:$true] %s609
          %612 = dma.hbm_to_vmem [thread:$0]  %s12, 16, %s610, [#allocation21]
        $region60: #{tpu_custom_call.1} parent=11 // pred_fallthru
          _
        // Predicated region
        $region61: #{tpu_custom_call.1} parent=11 // pred_check
          %p613 = pneg %p341
        $region62: #{tpu_custom_call.1} parent=11 // pred_check_branch
          %615 = sbr.rel (%p613) target = $region64
        $region63: #{tpu_custom_call.1} parent=11 // pred_region
          %s617 = ssub.s32 1024, 1024
          %618 = vsyncadd [#allocation24], %s617
          %s619 = sshll.u32 [#allocation23], 4
          %s620 = int_to_ptr.vmem [resolvable:$true] %s619
          %625 = dma.hbm_to_vmem [thread:$0]  %s13, 1024, %s620, [#allocation24], 64, 64, 4
        $region64: #{tpu_custom_call.1} parent=11 // pred_fallthru
          _
        // Predicated region
        $region65: #{tpu_custom_call.1} parent=11 // pred_check
          %p626 = pneg %p362
        $region66: #{tpu_custom_call.1} parent=11 // pred_check_branch
          %628 = sbr.rel (%p626) target = $region68
        $region67: #{tpu_custom_call.1} parent=11 // pred_region
          %s630 = ssub.s32 16, 16
          %631 = vsyncadd [#allocation24], %s630
          %s633 = sshll.u32 [#allocation25], 4
          %s634 = int_to_ptr.vmem [resolvable:$true] %s633
          %636 = dma.hbm_to_vmem [thread:$0]  %s14, 16, %s634, [#allocation24]
        $region68: #{tpu_custom_call.1} parent=11 // pred_fallthru
          _
        // Predicated region
        $region69: #{tpu_custom_call.1} parent=11 // pred_check
          %p637 = pneg %p383
        $region70: #{tpu_custom_call.1} parent=11 // pred_check_branch
          %639 = sbr.rel (%p637) target = $region72
        $region71: #{tpu_custom_call.1} parent=11 // pred_region
          %s641 = ssub.s32 16, 16
          %642 = vsyncadd [#allocation27], %s641
          %s644 = sshll.u32 [#allocation26], 4
          %s645 = int_to_ptr.vmem [resolvable:$true] %s644
          %647 = dma.hbm_to_vmem [thread:$0]  %s15, 16, %s645, [#allocation27]
        $region72: #{tpu_custom_call.1} parent=11 // pred_fallthru
          _
        // Predicated region
        $region73: #{tpu_custom_call.1} parent=11 // pred_check
          %p648 = pneg %p404
        $region74: #{tpu_custom_call.1} parent=11 // pred_check_branch
          %650 = sbr.rel (%p648) target = $region76
        $region75: #{tpu_custom_call.1} parent=11 // pred_region
          %s652 = ssub.s32 16, 16
          %653 = vsyncadd [#allocation27], %s652
          %s655 = sshll.u32 [#allocation28], 4
          %s656 = int_to_ptr.vmem [resolvable:$true] %s655
          %658 = dma.hbm_to_vmem [thread:$0]  %s16, 16, %s656, [#allocation27]
        $region76: #{tpu_custom_call.1} parent=11 // pred_fallthru
          _
      $region12: #{tpu_custom_call.1} parent=5 // pred_fallthru
        _
      %p659 = scmp.lt.s32.totalorder %s42, 2
      // Predicated region
      $region77: #{tpu_custom_call.1} parent=5 // pred_check
        %p660 = pneg %p659
      $region78: #{tpu_custom_call.1} parent=5 // pred_check_branch
        %662 = sbr.rel (%p660) target = $region80
      $region79: #{tpu_custom_call.1} parent=5 // pred_region
        // Predicated region
        $region81: #{tpu_custom_call.1} parent=79 // pred_check
          %p663 = pneg %p62
        $region82: #{tpu_custom_call.1} parent=79 // pred_check_branch
          %665 = sbr.rel (%p663) target = $region84
        $region83: #{tpu_custom_call.1} parent=79 // pred_region
          %s666 = sand.u32 %s52, 1
          %s667 = scalar_lea.sflag [#allocation3], %s666
          %s668 = sand.u32 %s52, 1
          %s669 = smul.addr %s668, 8
          %s670 = scalar_lea.vmem [#allocation2], %s669
          %s672 = ssub.s32 128, 128
          %673 = vsyncadd %s667, %s672
          %s674 = smul.addr %s42, 128
          %s675 = scalar_lea.hbm %s0, %s674
          %s677 = sshll.u32 %s670, 4
          %s678 = int_to_ptr.vmem [resolvable:$true] %s677
          %680 = dma.hbm_to_vmem [thread:$0]  %s675, 128, %s678, %s667
        $region84: #{tpu_custom_call.1} parent=79 // pred_fallthru
          _
      $region80: #{tpu_custom_call.1} parent=5 // pred_fallthru
        _
      %p681 = scmp.le.s32.totalorder 1, %s42
      %p682 = scmp.lt.s32.totalorder %s42, 3
      %p683 = pnand %p681, %p682
      %p684 = pneg %p683
      // Predicated region
      $region85: #{tpu_custom_call.1} parent=5 // pred_check
        _
      $region86: #{tpu_custom_call.1} parent=5 // pred_check_branch
        %686 = sbr.rel (%p683) target = $region88
      $region87: #{tpu_custom_call.1} parent=5 // pred_region
        %s687 = ssub.s32 %s42, 1
        %s688 = sand.u32 %s55, 1
        %s689 = scalar_lea.sflag [#allocation3], %s688
        %s690 = sand.u32 %s55, 1
        %s691 = smul.addr %s690, 8
        %s692 = scalar_lea.vmem [#allocation2], %s691
        // Predicated region
        $region89: #{tpu_custom_call.1} parent=87 // pred_check
          %p693 = pneg %p68
        $region90: #{tpu_custom_call.1} parent=87 // pred_check_branch
          %695 = sbr.rel (%p693) target = $region92
        $region91: #{tpu_custom_call.1} parent=87 // pred_region
          %696 = dma.done %s689, 128
        $region92: #{tpu_custom_call.1} parent=87 // pred_fallthru
          _
        // Predicated region
        $region93: #{tpu_custom_call.1} parent=87 // pred_check
          %p697 = pneg %p89
        $region94: #{tpu_custom_call.1} parent=87 // pred_check_branch
          %699 = sbr.rel (%p697) target = $region96
        $region95: #{tpu_custom_call.1} parent=87 // pred_region
          %700 = dma.done [#allocation6], 2048
        $region96: #{tpu_custom_call.1} parent=87 // pred_fallthru
          _
        // Predicated region
        $region97: #{tpu_custom_call.1} parent=87 // pred_check
          %p701 = pneg %p110
        $region98: #{tpu_custom_call.1} parent=87 // pred_check_branch
          %703 = sbr.rel (%p701) target = $region100
        $region99: #{tpu_custom_call.1} parent=87 // pred_region
          %704 = dma.done [#allocation6], 32
        $region100: #{tpu_custom_call.1} parent=87 // pred_fallthru
          _
        // Predicated region
        $region101: #{tpu_custom_call.1} parent=87 // pred_check
          %p705 = pneg %p131
        $region102: #{tpu_custom_call.1} parent=87 // pred_check_branch
          %707 = sbr.rel (%p705) target = $region104
        $region103: #{tpu_custom_call.1} parent=87 // pred_region
          %708 = dma.done [#allocation9], 2048
        $region104: #{tpu_custom_call.1} parent=87 // pred_fallthru
          _
        // Predicated region
        $region105: #{tpu_custom_call.1} parent=87 // pred_check
          %p709 = pneg %p152
        $region106: #{tpu_custom_call.1} parent=87 // pred_check_branch
          %711 = sbr.rel (%p709) target = $region108
        $region107: #{tpu_custom_call.1} parent=87 // pred_region
          %712 = dma.done [#allocation9], 32
        $region108: #{tpu_custom_call.1} parent=87 // pred_fallthru
          _
        // Predicated region
        $region109: #{tpu_custom_call.1} parent=87 // pred_check
          %p713 = pneg %p173
        $region110: #{tpu_custom_call.1} parent=87 // pred_check_branch
          %715 = sbr.rel (%p713) target = $region112
        $region111: #{tpu_custom_call.1} parent=87 // pred_region
          %716 = dma.done [#allocation12], 2048
        $region112: #{tpu_custom_call.1} parent=87 // pred_fallthru
          _
        // Predicated region
        $region113: #{tpu_custom_call.1} parent=87 // pred_check
          %p717 = pneg %p194
        $region114: #{tpu_custom_call.1} parent=87 // pred_check_branch
          %719 = sbr.rel (%p717) target = $region116
        $region115: #{tpu_custom_call.1} parent=87 // pred_region
          %720 = dma.done [#allocation12], 32
        $region116: #{tpu_custom_call.1} parent=87 // pred_fallthru
          _
        // Predicated region
        $region117: #{tpu_custom_call.1} parent=87 // pred_check
          %p721 = pneg %p215
        $region118: #{tpu_custom_call.1} parent=87 // pred_check_branch
          %723 = sbr.rel (%p721) target = $region120
        $region119: #{tpu_custom_call.1} parent=87 // pred_region
          %724 = dma.done [#allocation15], 2048
        $region120: #{tpu_custom_call.1} parent=87 // pred_fallthru
          _
        // Predicated region
        $region121: #{tpu_custom_call.1} parent=87 // pred_check
          %p725 = pneg %p236
        $region122: #{tpu_custom_call.1} parent=87 // pred_check_branch
          %727 = sbr.rel (%p725) target = $region124
        $region123: #{tpu_custom_call.1} parent=87 // pred_region
          %728 = dma.done [#allocation15], 16
        $region124: #{tpu_custom_call.1} parent=87 // pred_fallthru
          _
        // Predicated region
        $region125: #{tpu_custom_call.1} parent=87 // pred_check
          %p729 = pneg %p257
        $region126: #{tpu_custom_call.1} parent=87 // pred_check_branch
          %731 = sbr.rel (%p729) target = $region128
        $region127: #{tpu_custom_call.1} parent=87 // pred_region
          %732 = dma.done [#allocation18], 16
        $region128: #{tpu_custom_call.1} parent=87 // pred_fallthru
          _
        // Predicated region
        $region129: #{tpu_custom_call.1} parent=87 // pred_check
          %p733 = pneg %p278
        $region130: #{tpu_custom_call.1} parent=87 // pred_check_branch
          %735 = sbr.rel (%p733) target = $region132
        $region131: #{tpu_custom_call.1} parent=87 // pred_region
          %736 = dma.done [#allocation18], 16
        $region132: #{tpu_custom_call.1} parent=87 // pred_fallthru
          _
        // Predicated region
        $region133: #{tpu_custom_call.1} parent=87 // pred_check
          %p737 = pneg %p299
        $region134: #{tpu_custom_call.1} parent=87 // pred_check_branch
          %739 = sbr.rel (%p737) target = $region136
        $region135: #{tpu_custom_call.1} parent=87 // pred_region
          %740 = dma.done [#allocation21], 1024
        $region136: #{tpu_custom_call.1} parent=87 // pred_fallthru
          _
        // Predicated region
        $region137: #{tpu_custom_call.1} parent=87 // pred_check
          %p741 = pneg %p320
        $region138: #{tpu_custom_call.1} parent=87 // pred_check_branch
          %743 = sbr.rel (%p741) target = $region140
        $region139: #{tpu_custom_call.1} parent=87 // pred_region
          %744 = dma.done [#allocation21], 16
        $region140: #{tpu_custom_call.1} parent=87 // pred_fallthru
          _
        // Predicated region
        $region141: #{tpu_custom_call.1} parent=87 // pred_check
          %p745 = pneg %p341
        $region142: #{tpu_custom_call.1} parent=87 // pred_check_branch
          %747 = sbr.rel (%p745) target = $region144
        $region143: #{tpu_custom_call.1} parent=87 // pred_region
          %748 = dma.done [#allocation24], 1024
        $region144: #{tpu_custom_call.1} parent=87 // pred_fallthru
          _
        // Predicated region
        $region145: #{tpu_custom_call.1} parent=87 // pred_check
          %p749 = pneg %p362
        $region146: #{tpu_custom_call.1} parent=87 // pred_check_branch
          %751 = sbr.rel (%p749) target = $region148
        $region147: #{tpu_custom_call.1} parent=87 // pred_region
          %752 = dma.done [#allocation24], 16
        $region148: #{tpu_custom_call.1} parent=87 // pred_fallthru
          _
        // Predicated region
        $region149: #{tpu_custom_call.1} parent=87 // pred_check
          %p753 = pneg %p383
        $region150: #{tpu_custom_call.1} parent=87 // pred_check_branch
          %755 = sbr.rel (%p753) target = $region152
        $region151: #{tpu_custom_call.1} parent=87 // pred_region
          %756 = dma.done [#allocation27], 16
        $region152: #{tpu_custom_call.1} parent=87 // pred_fallthru
          _
        // Predicated region
        $region153: #{tpu_custom_call.1} parent=87 // pred_check
          %p757 = pneg %p404
        $region154: #{tpu_custom_call.1} parent=87 // pred_check_branch
          %759 = sbr.rel (%p757) target = $region156
        $region155: #{tpu_custom_call.1} parent=87 // pred_region
          %760 = dma.done [#allocation27], 16
        $region156: #{tpu_custom_call.1} parent=87 // pred_fallthru
          _
        %s761 = sand.u32 %s55, 1
        %s762 = scalar_lea.sflag [#allocation3], %s761
        %s763 = sand.u32 %s55, 1
        %s764 = smul.addr %s763, 8
        %s765 = scalar_lea.vmem [#allocation2], %s764
        %p766 = pneg %p68
        %p767 = pneg %p65
        %p768 = pneg %p89
        %p769 = pneg %p86
        %p770 = pneg %p110
        %p771 = pneg %p107
        %p772 = pneg %p131
        %p773 = pneg %p128
        %p774 = pneg %p152
        %p775 = pneg %p149
        %p776 = pneg %p173
        %p777 = pneg %p170
        %p778 = pneg %p194
        %p779 = pneg %p191
        %p780 = pneg %p215
        %p781 = pneg %p212
        %p782 = pneg %p236
        %p783 = pneg %p233
        %p784 = pneg %p257
        %p785 = pneg %p254
        %p786 = pneg %p278
        %p787 = pneg %p275
        %p788 = pneg %p299
        %p789 = pneg %p296
        %p790 = pneg %p320
        %p791 = pneg %p317
        %p792 = pneg %p341
        %p793 = pneg %p338
        %p794 = pneg %p362
        %p795 = pneg %p359
        %p796 = pneg %p383
        %p797 = pneg %p380
        %p798 = pneg %p404
        %p799 = pneg %p401
        %p800 = pneg %p430
        %p801 = pneg %p427
        %s802 = sand.u32 %s417, 1
        %s803 = scalar_lea.sflag [#allocation4], %s802
        %s804 = sand.u32 %s417, 1
        %s805 = smul.addr %s804, 8
        %s806 = scalar_lea.vmem [#allocation29], %s805
        %p807 = pneg %p456
        %p808 = pneg %p453
        %s809 = sand.u32 %s443, 1
        %s810 = scalar_lea.sflag [#allocation31], %s809
        %s811 = sand.u32 %s443, 1
        %s812 = smul.addr %s811, 16
        %s813 = scalar_lea.vmem [#allocation30], %s812
        %v815 = vld [vmem:[%s692] sm:$0xff]
        %v816 = vpack.c.bf16 %v815, %v815
        %v817 = vld [vmem:[#allocation5] sm:$0xff]
        %v818 = vld [vmem:[#allocation5 + $0x8] sm:$0xff]
        %v819 = vld [vmem:[#allocation5 + $0x10] sm:$0xff]
        %v820 = vld [vmem:[#allocation5 + $0x18] sm:$0xff]
        %v821 = vld [vmem:[#allocation5 + $0x20] sm:$0xff]
        %v822 = vld [vmem:[#allocation5 + $0x28] sm:$0xff]
        %v823 = vld [vmem:[#allocation5 + $0x30] sm:$0xff]
        %v824 = vld [vmem:[#allocation5 + $0x38] sm:$0xff]
        %v825 = vld [vmem:[#allocation5 + $0x40] sm:$0xff]
        %v826 = vld [vmem:[#allocation5 + $0x48] sm:$0xff]
        %v827 = vld [vmem:[#allocation5 + $0x50] sm:$0xff]
        %v828 = vld [vmem:[#allocation5 + $0x58] sm:$0xff]
        %v829 = vld [vmem:[#allocation5 + $0x60] sm:$0xff]
        %v830 = vld [vmem:[#allocation5 + $0x68] sm:$0xff]
        %v831 = vld [vmem:[#allocation5 + $0x70] sm:$0xff]
        %v832 = vld [vmem:[#allocation5 + $0x78] sm:$0xff]
        %v833 = vld [vmem:[#allocation7] sm:$0x3]
        %v835 = vlaneseq
        %v836 = vshrl.u32 %v835, 7
        %v837 = vsub.s32 0, %v836
        %v838 = vrot.slane %v833, %v837
        %v839 = vlaneseq
        %v840 = vshrl.u32 %v839, 7
        %v841 = vsub.s32 1, %v840
        %v842 = vrot.slane %v833, %v841
        %v861 = vunpack.c.l.b16 %v817
        %v862 = vunpack.c.h.b16 %v817
        %v863 = vunpack.c.l.b16 %v818
        %v864 = vunpack.c.h.b16 %v818
        %v865 = vunpack.c.l.b16 %v819
        %v866 = vunpack.c.h.b16 %v819
        %v867 = vunpack.c.l.b16 %v820
        %v868 = vunpack.c.h.b16 %v820
        %v869 = vunpack.c.l.b16 %v821
        %v870 = vunpack.c.h.b16 %v821
        %v871 = vunpack.c.l.b16 %v822
        %v872 = vunpack.c.h.b16 %v822
        %v873 = vunpack.c.l.b16 %v823
        %v874 = vunpack.c.h.b16 %v823
        %v875 = vunpack.c.l.b16 %v824
        %v876 = vunpack.c.h.b16 %v824
        %v877 = vunpack.c.l.b16 %v825
        %v878 = vunpack.c.h.b16 %v825
        %v879 = vunpack.c.l.b16 %v826
        %v880 = vunpack.c.h.b16 %v826
        %v881 = vunpack.c.l.b16 %v827
        %v882 = vunpack.c.h.b16 %v827
        %v883 = vunpack.c.l.b16 %v828
        %v884 = vunpack.c.h.b16 %v828
        %v885 = vunpack.c.l.b16 %v829
        %v886 = vunpack.c.h.b16 %v829
        %v887 = vunpack.c.l.b16 %v830
        %v888 = vunpack.c.h.b16 %v830
        %v889 = vunpack.c.l.b16 %v831
        %v890 = vunpack.c.h.b16 %v831
        %v891 = vunpack.c.l.b16 %v832
        %v892 = vunpack.c.h.b16 %v832
        %v893 = vpack.c.b16 %v863, %v861
        %v894 = vpack.c.b16 %v864, %v862
        %v895 = vpack.c.b16 %v867, %v865
        %v896 = vpack.c.b16 %v868, %v866
        %v897 = vpack.c.b16 %v871, %v869
        %v898 = vpack.c.b16 %v872, %v870
        %v899 = vpack.c.b16 %v875, %v873
        %v900 = vpack.c.b16 %v876, %v874
        %v901 = vpack.c.b16 %v879, %v877
        %v902 = vpack.c.b16 %v880, %v878
        %v903 = vpack.c.b16 %v883, %v881
        %v904 = vpack.c.b16 %v884, %v882
        %v905 = vpack.c.b16 %v887, %v885
        %v906 = vpack.c.b16 %v888, %v886
        %v907 = vpack.c.b16 %v891, %v889
        %v908 = vpack.c.b16 %v892, %v890
        %925 = vmatprep.subr.bf16.mxu0 %v894
        %926 = vmatpush1.bf16.msra.mxu0 %v893
        %927 = vmatprep.subr.bf16.mxu0 %v896
        %928 = vmatpush1.bf16.msra.mxu0 %v895
        %929 = vmatprep.subr.bf16.mxu0 %v898
        %930 = vmatpush1.bf16.msra.mxu0 %v897
        %931 = vmatprep.subr.bf16.mxu0 %v900
        %932 = vmatpush1.bf16.msra.mxu0 %v899
        %933 = vmatprep.subr.bf16.mxu0 %v902
        %934 = vmatpush1.bf16.msra.mxu0 %v901
        %935 = vmatprep.subr.bf16.mxu0 %v904
        %936 = vmatpush1.bf16.msra.mxu0 %v903
        %937 = vmatprep.subr.bf16.mxu0 %v906
        %938 = vmatpush1.bf16.msra.mxu0 %v905
        %939 = vmatprep.subr.bf16.mxu0 %v908
        %940 = vmatpush1.bf16.msra.mxu0 %v907
        %941 = vmatprep.subr.bf16.mxu0 0
        %942 = vmatpush1.bf16.msra.mxu0 0
        %943 = vmatprep.subr.bf16.mxu0 0
        %944 = vmatpush1.bf16.msra.mxu0 0
        %945 = vmatprep.subr.bf16.mxu0 0
        %946 = vmatpush1.bf16.msra.mxu0 0
        %947 = vmatprep.subr.bf16.mxu0 0
        %948 = vmatpush1.bf16.msra.mxu0 0
        %949 = vmatprep.subr.bf16.mxu0 0
        %950 = vmatpush1.bf16.msra.mxu0 0
        %951 = vmatprep.subr.bf16.mxu0 0
        %952 = vmatpush1.bf16.msra.mxu0 0
        %953 = vmatprep.subr.bf16.mxu0 0
        %954 = vmatpush1.bf16.msra.mxu0 0
        %955 = vmatprep.subr.bf16.mxu0 0
        %956 = vmatpush1.bf16.msra.mxu0 0
        %957 = vmatprep.mubr.bf16.mxu0 0
        %958 = vmatmul.mubr.bf16.gmra.mrb[0].mxu0 %v816
        %v959 = vpop.f32.mrb[0].mxu0
        %v960 = vadd.f32 %v838, %v959
        %v961 = vpop.f32.mrb[0].mxu0
        %v962 = vadd.f32 %v842, %v961
        %v963 = vpop.f32.mrb[0].mxu0
        %v964 = vpop.f32.mrb[0].mxu0
        %965 = vdwg.mxu0
        %v966 = vld [vmem:[#allocation8] sm:$0xff]
        %v967 = vld [vmem:[#allocation8 + $0x8] sm:$0xff]
        %v968 = vld [vmem:[#allocation8 + $0x10] sm:$0xff]
        %v969 = vld [vmem:[#allocation8 + $0x18] sm:$0xff]
        %v970 = vld [vmem:[#allocation8 + $0x20] sm:$0xff]
        %v971 = vld [vmem:[#allocation8 + $0x28] sm:$0xff]
        %v972 = vld [vmem:[#allocation8 + $0x30] sm:$0xff]
        %v973 = vld [vmem:[#allocation8 + $0x38] sm:$0xff]
        %v974 = vld [vmem:[#allocation8 + $0x40] sm:$0xff]
        %v975 = vld [vmem:[#allocation8 + $0x48] sm:$0xff]
        %v976 = vld [vmem:[#allocation8 + $0x50] sm:$0xff]
        %v977 = vld [vmem:[#allocation8 + $0x58] sm:$0xff]
        %v978 = vld [vmem:[#allocation8 + $0x60] sm:$0xff]
        %v979 = vld [vmem:[#allocation8 + $0x68] sm:$0xff]
        %v980 = vld [vmem:[#allocation8 + $0x70] sm:$0xff]
        %v981 = vld [vmem:[#allocation8 + $0x78] sm:$0xff]
        %v982 = vld [vmem:[#allocation10] sm:$0x3]
        %v984 = vlaneseq
        %v985 = vshrl.u32 %v984, 7
        %v986 = vsub.s32 0, %v985
        %v987 = vrot.slane %v982, %v986
        %v988 = vlaneseq
        %v989 = vshrl.u32 %v988, 7
        %v990 = vsub.s32 1, %v989
        %v991 = vrot.slane %v982, %v990
        %v1010 = vunpack.c.l.b16 %v966
        %v1011 = vunpack.c.h.b16 %v966
        %v1012 = vunpack.c.l.b16 %v967
        %v1013 = vunpack.c.h.b16 %v967
        %v1014 = vunpack.c.l.b16 %v968
        %v1015 = vunpack.c.h.b16 %v968
        %v1016 = vunpack.c.l.b16 %v969
        %v1017 = vunpack.c.h.b16 %v969
        %v1018 = vunpack.c.l.b16 %v970
        %v1019 = vunpack.c.h.b16 %v970
        %v1020 = vunpack.c.l.b16 %v971
        %v1021 = vunpack.c.h.b16 %v971
        %v1022 = vunpack.c.l.b16 %v972
        %v1023 = vunpack.c.h.b16 %v972
        %v1024 = vunpack.c.l.b16 %v973
        %v1025 = vunpack.c.h.b16 %v973
        %v1026 = vunpack.c.l.b16 %v974
        %v1027 = vunpack.c.h.b16 %v974
        %v1028 = vunpack.c.l.b16 %v975
        %v1029 = vunpack.c.h.b16 %v975
        %v1030 = vunpack.c.l.b16 %v976
        %v1031 = vunpack.c.h.b16 %v976
        %v1032 = vunpack.c.l.b16 %v977
        %v1033 = vunpack.c.h.b16 %v977
        %v1034 = vunpack.c.l.b16 %v978
        %v1035 = vunpack.c.h.b16 %v978
        %v1036 = vunpack.c.l.b16 %v979
        %v1037 = vunpack.c.h.b16 %v979
        %v1038 = vunpack.c.l.b16 %v980
        %v1039 = vunpack.c.h.b16 %v980
        %v1040 = vunpack.c.l.b16 %v981
        %v1041 = vunpack.c.h.b16 %v981
        %v1042 = vpack.c.b16 %v1012, %v1010
        %v1043 = vpack.c.b16 %v1013, %v1011
        %v1044 = vpack.c.b16 %v1016, %v1014
        %v1045 = vpack.c.b16 %v1017, %v1015
        %v1046 = vpack.c.b16 %v1020, %v1018
        %v1047 = vpack.c.b16 %v1021, %v1019
        %v1048 = vpack.c.b16 %v1024, %v1022
        %v1049 = vpack.c.b16 %v1025, %v1023
        %v1050 = vpack.c.b16 %v1028, %v1026
        %v1051 = vpack.c.b16 %v1029, %v1027
        %v1052 = vpack.c.b16 %v1032, %v1030
        %v1053 = vpack.c.b16 %v1033, %v1031
        %v1054 = vpack.c.b16 %v1036, %v1034
        %v1055 = vpack.c.b16 %v1037, %v1035
        %v1056 = vpack.c.b16 %v1040, %v1038
        %v1057 = vpack.c.b16 %v1041, %v1039
        %1074 = vmatprep.subr.bf16.mxu0 %v1043
        %1075 = vmatpush1.bf16.msra.mxu0 %v1042
        %1076 = vmatprep.subr.bf16.mxu0 %v1045
        %1077 = vmatpush1.bf16.msra.mxu0 %v1044
        %1078 = vmatprep.subr.bf16.mxu0 %v1047
        %1079 = vmatpush1.bf16.msra.mxu0 %v1046
        %1080 = vmatprep.subr.bf16.mxu0 %v1049
        %1081 = vmatpush1.bf16.msra.mxu0 %v1048
        %1082 = vmatprep.subr.bf16.mxu0 %v1051
        %1083 = vmatpush1.bf16.msra.mxu0 %v1050
        %1084 = vmatprep.subr.bf16.mxu0 %v1053
        %1085 = vmatpush1.bf16.msra.mxu0 %v1052
        %1086 = vmatprep.subr.bf16.mxu0 %v1055
        %1087 = vmatpush1.bf16.msra.mxu0 %v1054
        %1088 = vmatprep.subr.bf16.mxu0 %v1057
        %1089 = vmatpush1.bf16.msra.mxu0 %v1056
        %1090 = vmatprep.subr.bf16.mxu0 0
        %1091 = vmatpush1.bf16.msra.mxu0 0
        %1092 = vmatprep.subr.bf16.mxu0 0
        %1093 = vmatpush1.bf16.msra.mxu0 0
        %1094 = vmatprep.subr.bf16.mxu0 0
        %1095 = vmatpush1.bf16.msra.mxu0 0
        %1096 = vmatprep.subr.bf16.mxu0 0
        %1097 = vmatpush1.bf16.msra.mxu0 0
        %1098 = vmatprep.subr.bf16.mxu0 0
        %1099 = vmatpush1.bf16.msra.mxu0 0
        %1100 = vmatprep.subr.bf16.mxu0 0
        %1101 = vmatpush1.bf16.msra.mxu0 0
        %1102 = vmatprep.subr.bf16.mxu0 0
        %1103 = vmatpush1.bf16.msra.mxu0 0
        %1104 = vmatprep.subr.bf16.mxu0 0
        %1105 = vmatpush1.bf16.msra.mxu0 0
        %1106 = vmatprep.mubr.bf16.mxu0 0
        %1107 = vmatmul.mubr.bf16.gmra.mrb[0].mxu0 %v816
        %v1108 = vpop.f32.mrb[0].mxu0
        %v1109 = vadd.f32 %v987, %v1108
        %v1110 = vpop.f32.mrb[0].mxu0
        %v1111 = vadd.f32 %v991, %v1110
        %v1112 = vpop.f32.mrb[0].mxu0
        %v1113 = vpop.f32.mrb[0].mxu0
        %1114 = vdwg.mxu0
        %v1115 = vld [vmem:[#allocation11] sm:$0xff]
        %v1116 = vld [vmem:[#allocation11 + $0x8] sm:$0xff]
        %v1117 = vld [vmem:[#allocation11 + $0x10] sm:$0xff]
        %v1118 = vld [vmem:[#allocation11 + $0x18] sm:$0xff]
        %v1119 = vld [vmem:[#allocation11 + $0x20] sm:$0xff]
        %v1120 = vld [vmem:[#allocation11 + $0x28] sm:$0xff]
        %v1121 = vld [vmem:[#allocation11 + $0x30] sm:$0xff]
        %v1122 = vld [vmem:[#allocation11 + $0x38] sm:$0xff]
        %v1123 = vld [vmem:[#allocation11 + $0x40] sm:$0xff]
        %v1124 = vld [vmem:[#allocation11 + $0x48] sm:$0xff]
        %v1125 = vld [vmem:[#allocation11 + $0x50] sm:$0xff]
        %v1126 = vld [vmem:[#allocation11 + $0x58] sm:$0xff]
        %v1127 = vld [vmem:[#allocation11 + $0x60] sm:$0xff]
        %v1128 = vld [vmem:[#allocation11 + $0x68] sm:$0xff]
        %v1129 = vld [vmem:[#allocation11 + $0x70] sm:$0xff]
        %v1130 = vld [vmem:[#allocation11 + $0x78] sm:$0xff]
        %v1131 = vld [vmem:[#allocation13] sm:$0x3]
        %v1133 = vlaneseq
        %v1134 = vshrl.u32 %v1133, 7
        %v1135 = vsub.s32 0, %v1134
        %v1136 = vrot.slane %v1131, %v1135
        %v1137 = vlaneseq
        %v1138 = vshrl.u32 %v1137, 7
        %v1139 = vsub.s32 1, %v1138
        %v1140 = vrot.slane %v1131, %v1139
        %v1159 = vunpack.c.l.b16 %v1115
        %v1160 = vunpack.c.h.b16 %v1115
        %v1161 = vunpack.c.l.b16 %v1116
        %v1162 = vunpack.c.h.b16 %v1116
        %v1163 = vunpack.c.l.b16 %v1117
        %v1164 = vunpack.c.h.b16 %v1117
        %v1165 = vunpack.c.l.b16 %v1118
        %v1166 = vunpack.c.h.b16 %v1118
        %v1167 = vunpack.c.l.b16 %v1119
        %v1168 = vunpack.c.h.b16 %v1119
        %v1169 = vunpack.c.l.b16 %v1120
        %v1170 = vunpack.c.h.b16 %v1120
        %v1171 = vunpack.c.l.b16 %v1121
        %v1172 = vunpack.c.h.b16 %v1121
        %v1173 = vunpack.c.l.b16 %v1122
        %v1174 = vunpack.c.h.b16 %v1122
        %v1175 = vunpack.c.l.b16 %v1123
        %v1176 = vunpack.c.h.b16 %v1123
        %v1177 = vunpack.c.l.b16 %v1124
        %v1178 = vunpack.c.h.b16 %v1124
        %v1179 = vunpack.c.l.b16 %v1125
        %v1180 = vunpack.c.h.b16 %v1125
        %v1181 = vunpack.c.l.b16 %v1126
        %v1182 = vunpack.c.h.b16 %v1126
        %v1183 = vunpack.c.l.b16 %v1127
        %v1184 = vunpack.c.h.b16 %v1127
        %v1185 = vunpack.c.l.b16 %v1128
        %v1186 = vunpack.c.h.b16 %v1128
        %v1187 = vunpack.c.l.b16 %v1129
        %v1188 = vunpack.c.h.b16 %v1129
        %v1189 = vunpack.c.l.b16 %v1130
        %v1190 = vunpack.c.h.b16 %v1130
        %v1191 = vpack.c.b16 %v1161, %v1159
        %v1192 = vpack.c.b16 %v1162, %v1160
        %v1193 = vpack.c.b16 %v1165, %v1163
        %v1194 = vpack.c.b16 %v1166, %v1164
        %v1195 = vpack.c.b16 %v1169, %v1167
        %v1196 = vpack.c.b16 %v1170, %v1168
        %v1197 = vpack.c.b16 %v1173, %v1171
        %v1198 = vpack.c.b16 %v1174, %v1172
        %v1199 = vpack.c.b16 %v1177, %v1175
        %v1200 = vpack.c.b16 %v1178, %v1176
        %v1201 = vpack.c.b16 %v1181, %v1179
        %v1202 = vpack.c.b16 %v1182, %v1180
        %v1203 = vpack.c.b16 %v1185, %v1183
        %v1204 = vpack.c.b16 %v1186, %v1184
        %v1205 = vpack.c.b16 %v1189, %v1187
        %v1206 = vpack.c.b16 %v1190, %v1188
        %1223 = vmatprep.subr.bf16.mxu0 %v1192
        %1224 = vmatpush1.bf16.msra.mxu0 %v1191
        %1225 = vmatprep.subr.bf16.mxu0 %v1194
        %1226 = vmatpush1.bf16.msra.mxu0 %v1193
        %1227 = vmatprep.subr.bf16.mxu0 %v1196
        %1228 = vmatpush1.bf16.msra.mxu0 %v1195
        %1229 = vmatprep.subr.bf16.mxu0 %v1198
        %1230 = vmatpush1.bf16.msra.mxu0 %v1197
        %1231 = vmatprep.subr.bf16.mxu0 %v1200
        %1232 = vmatpush1.bf16.msra.mxu0 %v1199
        %1233 = vmatprep.subr.bf16.mxu0 %v1202
        %1234 = vmatpush1.bf16.msra.mxu0 %v1201
        %1235 = vmatprep.subr.bf16.mxu0 %v1204
        %1236 = vmatpush1.bf16.msra.mxu0 %v1203
        %1237 = vmatprep.subr.bf16.mxu0 %v1206
        %1238 = vmatpush1.bf16.msra.mxu0 %v1205
        %1239 = vmatprep.subr.bf16.mxu0 0
        %1240 = vmatpush1.bf16.msra.mxu0 0
        %1241 = vmatprep.subr.bf16.mxu0 0
        %1242 = vmatpush1.bf16.msra.mxu0 0
        %1243 = vmatprep.subr.bf16.mxu0 0
        %1244 = vmatpush1.bf16.msra.mxu0 0
        %1245 = vmatprep.subr.bf16.mxu0 0
        %1246 = vmatpush1.bf16.msra.mxu0 0
        %1247 = vmatprep.subr.bf16.mxu0 0
        %1248 = vmatpush1.bf16.msra.mxu0 0
        %1249 = vmatprep.subr.bf16.mxu0 0
        %1250 = vmatpush1.bf16.msra.mxu0 0
        %1251 = vmatprep.subr.bf16.mxu0 0
        %1252 = vmatpush1.bf16.msra.mxu0 0
        %1253 = vmatprep.subr.bf16.mxu0 0
        %1254 = vmatpush1.bf16.msra.mxu0 0
        %1255 = vmatprep.mubr.bf16.mxu0 0
        %1256 = vmatmul.mubr.bf16.gmra.mrb[0].mxu0 %v816
        %v1257 = vpop.f32.mrb[0].mxu0
        %v1258 = vadd.f32 %v1136, %v1257
        %v1259 = vpop.f32.mrb[0].mxu0
        %v1260 = vadd.f32 %v1140, %v1259
        %v1261 = vpop.f32.mrb[0].mxu0
        %v1262 = vpop.f32.mrb[0].mxu0
        %1263 = vdwg.mxu0
        %v1264 = vpack.c.bf16 %v960, %v960
        %v1265 = vpack.c.bf16 %v962, %v962
        %v1266 = vpack.c.bf16 %v1109, %v1109
        %v1267 = vpack.c.bf16 %v1111, %v1111
        %v1268 = vpack.c.bf16 %v1258, %v1258
        %v1269 = vpack.c.bf16 %v1260, %v1260
        %v1270 = vld [vmem:[#allocation16] sm:$0x1]
        %v1272 = vlaneseq
        %v1273 = vshrl.u32 %v1272, 7
        %v1274 = vsub.s32 0, %v1273
        %v1275 = vrot.slane %v1270, %v1274
        %v1277 = vadd.f32 %v1275, 0.0
        %1278 = vmatprep.subr.bf16.mxu0 0
        %1279 = vmatpush1.bf16.xpose.msra.mxu0 %v1266
        %1280 = vmatprep.subr.bf16.mxu0 0
        %1281 = vmatpush1.bf16.xpose.msra.mxu0 0
        %1282 = vmatprep.subr.bf16.mxu0 0
        %1283 = vmatpush1.bf16.xpose.msra.mxu0 0
        %1284 = vmatprep.subr.bf16.mxu0 0
        %1285 = vmatpush1.bf16.xpose.msra.mxu0 0
        %1286 = vmatprep.subr.bf16.mxu0 0
        %1287 = vmatpush1.bf16.xpose.msra.mxu0 0
        %1288 = vmatprep.subr.bf16.mxu0 0
        %1289 = vmatpush1.bf16.xpose.msra.mxu0 0
        %1290 = vmatprep.subr.bf16.mxu0 0
        %1291 = vmatpush1.bf16.xpose.msra.mxu0 0
        %1292 = vmatprep.subr.bf16.mxu0 0
        %1293 = vmatpush1.bf16.xpose.msra.mxu0 0
        %1294 = vmatprep.subr.bf16.mxu0 0
        %1295 = vmatpush1.bf16.xpose.msra.mxu0 0
        %1296 = vmatprep.subr.bf16.mxu0 0
        %1297 = vmatpush1.bf16.xpose.msra.mxu0 0
        %1298 = vmatprep.subr.bf16.mxu0 0
        %1299 = vmatpush1.bf16.xpose.msra.mxu0 0
        %1300 = vmatprep.subr.bf16.mxu0 0
        %1301 = vmatpush1.bf16.xpose.msra.mxu0 0
        %1302 = vmatprep.subr.bf16.mxu0 0
        %1303 = vmatpush1.bf16.xpose.msra.mxu0 0
        %1304 = vmatprep.subr.bf16.mxu0 0
        %1305 = vmatpush1.bf16.xpose.msra.mxu0 0
        %1306 = vmatprep.subr.bf16.mxu0 0
        %1307 = vmatpush1.bf16.xpose.msra.mxu0 0
        %1308 = vmatprep.subr.bf16.mxu0 0
        %1309 = vmatpush1.bf16.xpose.msra.mxu0 0
        %1310 = vmatprep.mubr.bf16.mxu0 0
        %1311 = vmatmul.mubr.bf16.gmra.mrb[0].mxu0 %v1264
        %v1312 = vpop.f32.mrb[0].mxu0
        %v1313 = vadd.f32 0.0, %v1312
        %v1314 = vpop.f32.mrb[0].mxu0
        %v1315 = vpop.f32.mrb[0].mxu0
        %v1316 = vpop.f32.mrb[0].mxu0
        %1317 = vdwg.mxu0
        %v1318 = vmul.f32 %v1313, 0.17677669
        %vm1319 = vcmask 64512
        %v1320 = vsel %vm1319, %v1318, -inf
        %1321 = vmax.xlane.f32.xlu0 %v1320
        %v1322 = vpop.xlane.xlu0 %1321
        %v1323 = vsub.f32 %v1318, %v1322
        %v1324 = vmul.f32 %v1323, 1.442695
        %v1325 = vpow.pop %v1324
        %v1326 = vsel %vm1319, %v1325, 0.0
        %1327 = vadd.xlane.f32.xlu0 %v1326
        %v1328 = vpop.xlane.xlu0 %1327
        %v1329 = vrcp.pop %v1328
        %v1330 = vmul.f32 %v1325, %v1329
        %1331 = vst.msk [vmem:[%s813] sm:$0xff] %vm1319, %v1330
        %v1332 = vpack.c.bf16 %v1330, %v1330
        %v1334 = vsel %vm1319, %v1332, 0
        %vm1336 = vcmask 1043456
        %v1338 = vsel %vm1336, %v1268, 0
        %1340 = vmatprep.subr.bf16.mxu0 0
        %1341 = vmatpush1.bf16.msra.mxu0 %v1338
        %1342 = vmatprep.subr.bf16.mxu0 0
        %1343 = vmatpush1.bf16.msra.mxu0 0
        %1344 = vmatprep.subr.bf16.mxu0 0
        %1345 = vmatpush1.bf16.msra.mxu0 0
        %1346 = vmatprep.subr.bf16.mxu0 0
        %1347 = vmatpush1.bf16.msra.mxu0 0
        %1348 = vmatprep.subr.bf16.mxu0 0
        %1349 = vmatpush1.bf16.msra.mxu0 0
        %1350 = vmatprep.subr.bf16.mxu0 0
        %1351 = vmatpush1.bf16.msra.mxu0 0
        %1352 = vmatprep.subr.bf16.mxu0 0
        %1353 = vmatpush1.bf16.msra.mxu0 0
        %1354 = vmatprep.subr.bf16.mxu0 0
        %1355 = vmatpush1.bf16.msra.mxu0 0
        %1356 = vmatprep.subr.bf16.mxu0 0
        %1357 = vmatpush1.bf16.msra.mxu0 0
        %1358 = vmatprep.subr.bf16.mxu0 0
        %1359 = vmatpush1.bf16.msra.mxu0 0
        %1360 = vmatprep.subr.bf16.mxu0 0
        %1361 = vmatpush1.bf16.msra.mxu0 0
        %1362 = vmatprep.subr.bf16.mxu0 0
        %1363 = vmatpush1.bf16.msra.mxu0 0
        %1364 = vmatprep.subr.bf16.mxu0 0
        %1365 = vmatpush1.bf16.msra.mxu0 0
        %1366 = vmatprep.subr.bf16.mxu0 0
        %1367 = vmatpush1.bf16.msra.mxu0 0
        %1368 = vmatprep.subr.bf16.mxu0 0
        %1369 = vmatpush1.bf16.msra.mxu0 0
        %1370 = vmatprep.subr.bf16.mxu0 0
        %1371 = vmatpush1.bf16.msra.mxu0 0
        %1372 = vmatprep.mubr.bf16.mxu0 0
        %1373 = vmatmul.mubr.bf16.gmra.mrb[0].mxu0 %v1334
        %v1374 = vpop.f32.mrb[0].mxu0
        %v1375 = vadd.f32 0.0, %v1374
        %v1376 = vpop.f32.mrb[0].mxu0
        %v1377 = vpop.f32.mrb[0].mxu0
        %v1378 = vpop.f32.mrb[0].mxu0
        %1379 = vdwg.mxu0
        %v1380 = vpack.c.bf16 %v1375, %v1375
        %v1381 = vld [vmem:[#allocation14] sm:$0xf]
        %v1382 = vld [vmem:[#allocation14 + $0x4] sm:$0xf]
        %v1383 = vld [vmem:[#allocation14 + $0x8] sm:$0xf]
        %v1384 = vld [vmem:[#allocation14 + $0xc] sm:$0xf]
        %v1385 = vld [vmem:[#allocation14 + $0x10] sm:$0xf]
        %v1386 = vld [vmem:[#allocation14 + $0x14] sm:$0xf]
        %v1387 = vld [vmem:[#allocation14 + $0x18] sm:$0xf]
        %v1388 = vld [vmem:[#allocation14 + $0x1c] sm:$0xf]
        %v1389 = vld [vmem:[#allocation14 + $0x20] sm:$0xf]
        %v1390 = vld [vmem:[#allocation14 + $0x24] sm:$0xf]
        %v1391 = vld [vmem:[#allocation14 + $0x28] sm:$0xf]
        %v1392 = vld [vmem:[#allocation14 + $0x2c] sm:$0xf]
        %v1393 = vld [vmem:[#allocation14 + $0x30] sm:$0xf]
        %v1394 = vld [vmem:[#allocation14 + $0x34] sm:$0xf]
        %v1395 = vld [vmem:[#allocation14 + $0x38] sm:$0xf]
        %v1396 = vld [vmem:[#allocation14 + $0x3c] sm:$0xf]
        %v1413 = vunpack.c.l.b16 %v1381
        %v1414 = vunpack.c.l.b16 %v1382
        %v1415 = vunpack.c.l.b16 %v1383
        %v1416 = vunpack.c.l.b16 %v1384
        %v1417 = vunpack.c.l.b16 %v1385
        %v1418 = vunpack.c.l.b16 %v1386
        %v1419 = vunpack.c.l.b16 %v1387
        %v1420 = vunpack.c.l.b16 %v1388
        %v1421 = vunpack.c.l.b16 %v1389
        %v1422 = vunpack.c.l.b16 %v1390
        %v1423 = vunpack.c.l.b16 %v1391
        %v1424 = vunpack.c.l.b16 %v1392
        %v1425 = vunpack.c.l.b16 %v1393
        %v1426 = vunpack.c.l.b16 %v1394
        %v1427 = vunpack.c.l.b16 %v1395
        %v1428 = vunpack.c.l.b16 %v1396
        %v1429 = vpack.c.b16 %v1414, %v1413
        %v1430 = vpack.c.b16 %v1416, %v1415
        %v1431 = vpack.c.b16 %v1418, %v1417
        %v1432 = vpack.c.b16 %v1420, %v1419
        %v1433 = vpack.c.b16 %v1422, %v1421
        %v1434 = vpack.c.b16 %v1424, %v1423
        %v1435 = vpack.c.b16 %v1426, %v1425
        %v1436 = vpack.c.b16 %v1428, %v1427
        %1445 = vmatprep.subr.bf16.mxu0 0
        %1446 = vmatpush1.bf16.msra.mxu0 %v1429
        %1447 = vmatprep.subr.bf16.mxu0 0
        %1448 = vmatpush1.bf16.msra.mxu0 %v1430
        %1449 = vmatprep.subr.bf16.mxu0 0
        %1450 = vmatpush1.bf16.msra.mxu0 %v1431
        %1451 = vmatprep.subr.bf16.mxu0 0
        %1452 = vmatpush1.bf16.msra.mxu0 %v1432
        %1453 = vmatprep.subr.bf16.mxu0 0
        %1454 = vmatpush1.bf16.msra.mxu0 %v1433
        %1455 = vmatprep.subr.bf16.mxu0 0
        %1456 = vmatpush1.bf16.msra.mxu0 %v1434
        %1457 = vmatprep.subr.bf16.mxu0 0
        %1458 = vmatpush1.bf16.msra.mxu0 %v1435
        %1459 = vmatprep.subr.bf16.mxu0 0
        %1460 = vmatpush1.bf16.msra.mxu0 %v1436
        %1461 = vmatprep.subr.bf16.mxu0 0
        %1462 = vmatpush1.bf16.msra.mxu0 0
        %1463 = vmatprep.subr.bf16.mxu0 0
        %1464 = vmatpush1.bf16.msra.mxu0 0
        %1465 = vmatprep.subr.bf16.mxu0 0
        %1466 = vmatpush1.bf16.msra.mxu0 0
        %1467 = vmatprep.subr.bf16.mxu0 0
        %1468 = vmatpush1.bf16.msra.mxu0 0
        %1469 = vmatprep.subr.bf16.mxu0 0
        %1470 = vmatpush1.bf16.msra.mxu0 0
        %1471 = vmatprep.subr.bf16.mxu0 0
        %1472 = vmatpush1.bf16.msra.mxu0 0
        %1473 = vmatprep.subr.bf16.mxu0 0
        %1474 = vmatpush1.bf16.msra.mxu0 0
        %1475 = vmatprep.subr.bf16.mxu0 0
        %1476 = vmatpush1.bf16.msra.mxu0 0
        %1477 = vmatprep.mubr.bf16.mxu0 0
        %1478 = vmatmul.mubr.bf16.gmra.mrb[0].mxu0 %v1380
        %v1479 = vpop.f32.mrb[0].mxu0
        %v1480 = vadd.f32 0.0, %v1479
        %v1481 = vpop.f32.mrb[0].mxu0
        %v1482 = vpop.f32.mrb[0].mxu0
        %v1483 = vpop.f32.mrb[0].mxu0
        %1484 = vdwg.mxu0
        %v1485 = vadd.f32 %v1277, %v1480
        %1486 = vmatprep.subr.bf16.mxu0 0
        %1487 = vmatpush1.bf16.xpose.msra.mxu0 %v1267
        %1488 = vmatprep.subr.bf16.mxu0 0
        %1489 = vmatpush1.bf16.xpose.msra.mxu0 0
        %1490 = vmatprep.subr.bf16.mxu0 0
        %1491 = vmatpush1.bf16.xpose.msra.mxu0 0
        %1492 = vmatprep.subr.bf16.mxu0 0
        %1493 = vmatpush1.bf16.xpose.msra.mxu0 0
        %1494 = vmatprep.subr.bf16.mxu0 0
        %1495 = vmatpush1.bf16.xpose.msra.mxu0 0
        %1496 = vmatprep.subr.bf16.mxu0 0
        %1497 = vmatpush1.bf16.xpose.msra.mxu0 0
        %1498 = vmatprep.subr.bf16.mxu0 0
        %1499 = vmatpush1.bf16.xpose.msra.mxu0 0
        %1500 = vmatprep.subr.bf16.mxu0 0
        %1501 = vmatpush1.bf16.xpose.msra.mxu0 0
        %1502 = vmatprep.subr.bf16.mxu0 0
        %1503 = vmatpush1.bf16.xpose.msra.mxu0 0
        %1504 = vmatprep.subr.bf16.mxu0 0
        %1505 = vmatpush1.bf16.xpose.msra.mxu0 0
        %1506 = vmatprep.subr.bf16.mxu0 0
        %1507 = vmatpush1.bf16.xpose.msra.mxu0 0
        %1508 = vmatprep.subr.bf16.mxu0 0
        %1509 = vmatpush1.bf16.xpose.msra.mxu0 0
        %1510 = vmatprep.subr.bf16.mxu0 0
        %1511 = vmatpush1.bf16.xpose.msra.mxu0 0
        %1512 = vmatprep.subr.bf16.mxu0 0
        %1513 = vmatpush1.bf16.xpose.msra.mxu0 0
        %1514 = vmatprep.subr.bf16.mxu0 0
        %1515 = vmatpush1.bf16.xpose.msra.mxu0 0
        %1516 = vmatprep.subr.bf16.mxu0 0
        %1517 = vmatpush1.bf16.xpose.msra.mxu0 0
        %1518 = vmatprep.mubr.bf16.mxu0 0
        %1519 = vmatmul.mubr.bf16.gmra.mrb[0].mxu0 %v1265
        %v1520 = vpop.f32.mrb[0].mxu0
        %v1521 = vadd.f32 0.0, %v1520
        %v1522 = vpop.f32.mrb[0].mxu0
        %v1523 = vpop.f32.mrb[0].mxu0
        %v1524 = vpop.f32.mrb[0].mxu0
        %1525 = vdwg.mxu0
        %v1526 = vmul.f32 %v1521, 0.17677669
        %v1527 = vsel %vm1319, %v1526, -inf
        %1528 = vmax.xlane.f32.xlu0 %v1527
        %v1529 = vpop.xlane.xlu0 %1528
        %v1530 = vsub.f32 %v1526, %v1529
        %v1531 = vmul.f32 %v1530, 1.442695
        %v1532 = vpow.pop %v1531
        %v1533 = vsel %vm1319, %v1532, 0.0
        %1534 = vadd.xlane.f32.xlu0 %v1533
        %v1535 = vpop.xlane.xlu0 %1534
        %v1536 = vrcp.pop %v1535
        %v1537 = vmul.f32 %v1532, %v1536
        %s1538 = scalar_lea.vmem %s813, 8 [#allocation30]
        %1539 = vst.msk [vmem:[%s1538] sm:$0xff] %vm1319, %v1537
        %v1540 = vpack.c.bf16 %v1537, %v1537
        %v1542 = vsel %vm1319, %v1540, 0
        %v1545 = vsel %vm1336, %v1269, 0
        %1547 = vmatprep.subr.bf16.mxu0 0
        %1548 = vmatpush1.bf16.msra.mxu0 %v1545
        %1549 = vmatprep.subr.bf16.mxu0 0
        %1550 = vmatpush1.bf16.msra.mxu0 0
        %1551 = vmatprep.subr.bf16.mxu0 0
        %1552 = vmatpush1.bf16.msra.mxu0 0
        %1553 = vmatprep.subr.bf16.mxu0 0
        %1554 = vmatpush1.bf16.msra.mxu0 0
        %1555 = vmatprep.subr.bf16.mxu0 0
        %1556 = vmatpush1.bf16.msra.mxu0 0
        %1557 = vmatprep.subr.bf16.mxu0 0
        %1558 = vmatpush1.bf16.msra.mxu0 0
        %1559 = vmatprep.subr.bf16.mxu0 0
        %1560 = vmatpush1.bf16.msra.mxu0 0
        %1561 = vmatprep.subr.bf16.mxu0 0
        %1562 = vmatpush1.bf16.msra.mxu0 0
        %1563 = vmatprep.subr.bf16.mxu0 0
        %1564 = vmatpush1.bf16.msra.mxu0 0
        %1565 = vmatprep.subr.bf16.mxu0 0
        %1566 = vmatpush1.bf16.msra.mxu0 0
        %1567 = vmatprep.subr.bf16.mxu0 0
        %1568 = vmatpush1.bf16.msra.mxu0 0
        %1569 = vmatprep.subr.bf16.mxu0 0
        %1570 = vmatpush1.bf16.msra.mxu0 0
        %1571 = vmatprep.subr.bf16.mxu0 0
        %1572 = vmatpush1.bf16.msra.mxu0 0
        %1573 = vmatprep.subr.bf16.mxu0 0
        %1574 = vmatpush1.bf16.msra.mxu0 0
        %1575 = vmatprep.subr.bf16.mxu0 0
        %1576 = vmatpush1.bf16.msra.mxu0 0
        %1577 = vmatprep.subr.bf16.mxu0 0
        %1578 = vmatpush1.bf16.msra.mxu0 0
        %1579 = vmatprep.mubr.bf16.mxu0 0
        %1580 = vmatmul.mubr.bf16.gmra.mrb[0].mxu0 %v1542
        %v1581 = vpop.f32.mrb[0].mxu0
        %v1582 = vadd.f32 0.0, %v1581
        %v1583 = vpop.f32.mrb[0].mxu0
        %v1584 = vpop.f32.mrb[0].mxu0
        %v1585 = vpop.f32.mrb[0].mxu0
        %1586 = vdwg.mxu0
        %v1587 = vpack.c.bf16 %v1582, %v1582
        %v1588 = vld [vmem:[#allocation14 + $0x40] sm:$0xf]
        %v1589 = vld [vmem:[#allocation14 + $0x44] sm:$0xf]
        %v1590 = vld [vmem:[#allocation14 + $0x48] sm:$0xf]
        %v1591 = vld [vmem:[#allocation14 + $0x4c] sm:$0xf]
        %v1592 = vld [vmem:[#allocation14 + $0x50] sm:$0xf]
        %v1593 = vld [vmem:[#allocation14 + $0x54] sm:$0xf]
        %v1594 = vld [vmem:[#allocation14 + $0x58] sm:$0xf]
        %v1595 = vld [vmem:[#allocation14 + $0x5c] sm:$0xf]
        %v1596 = vld [vmem:[#allocation14 + $0x60] sm:$0xf]
        %v1597 = vld [vmem:[#allocation14 + $0x64] sm:$0xf]
        %v1598 = vld [vmem:[#allocation14 + $0x68] sm:$0xf]
        %v1599 = vld [vmem:[#allocation14 + $0x6c] sm:$0xf]
        %v1600 = vld [vmem:[#allocation14 + $0x70] sm:$0xf]
        %v1601 = vld [vmem:[#allocation14 + $0x74] sm:$0xf]
        %v1602 = vld [vmem:[#allocation14 + $0x78] sm:$0xf]
        %v1603 = vld [vmem:[#allocation14 + $0x7c] sm:$0xf]
        %v1620 = vunpack.c.l.b16 %v1588
        %v1621 = vunpack.c.l.b16 %v1589
        %v1622 = vunpack.c.l.b16 %v1590
        %v1623 = vunpack.c.l.b16 %v1591
        %v1624 = vunpack.c.l.b16 %v1592
        %v1625 = vunpack.c.l.b16 %v1593
        %v1626 = vunpack.c.l.b16 %v1594
        %v1627 = vunpack.c.l.b16 %v1595
        %v1628 = vunpack.c.l.b16 %v1596
        %v1629 = vunpack.c.l.b16 %v1597
        %v1630 = vunpack.c.l.b16 %v1598
        %v1631 = vunpack.c.l.b16 %v1599
        %v1632 = vunpack.c.l.b16 %v1600
        %v1633 = vunpack.c.l.b16 %v1601
        %v1634 = vunpack.c.l.b16 %v1602
        %v1635 = vunpack.c.l.b16 %v1603
        %v1636 = vpack.c.b16 %v1621, %v1620
        %v1637 = vpack.c.b16 %v1623, %v1622
        %v1638 = vpack.c.b16 %v1625, %v1624
        %v1639 = vpack.c.b16 %v1627, %v1626
        %v1640 = vpack.c.b16 %v1629, %v1628
        %v1641 = vpack.c.b16 %v1631, %v1630
        %v1642 = vpack.c.b16 %v1633, %v1632
        %v1643 = vpack.c.b16 %v1635, %v1634
        %1652 = vmatprep.subr.bf16.mxu0 0
        %1653 = vmatpush1.bf16.msra.mxu0 %v1636
        %1654 = vmatprep.subr.bf16.mxu0 0
        %1655 = vmatpush1.bf16.msra.mxu0 %v1637
        %1656 = vmatprep.subr.bf16.mxu0 0
        %1657 = vmatpush1.bf16.msra.mxu0 %v1638
        %1658 = vmatprep.subr.bf16.mxu0 0
        %1659 = vmatpush1.bf16.msra.mxu0 %v1639
        %1660 = vmatprep.subr.bf16.mxu0 0
        %1661 = vmatpush1.bf16.msra.mxu0 %v1640
        %1662 = vmatprep.subr.bf16.mxu0 0
        %1663 = vmatpush1.bf16.msra.mxu0 %v1641
        %1664 = vmatprep.subr.bf16.mxu0 0
        %1665 = vmatpush1.bf16.msra.mxu0 %v1642
        %1666 = vmatprep.subr.bf16.mxu0 0
        %1667 = vmatpush1.bf16.msra.mxu0 %v1643
        %1668 = vmatprep.subr.bf16.mxu0 0
        %1669 = vmatpush1.bf16.msra.mxu0 0
        %1670 = vmatprep.subr.bf16.mxu0 0
        %1671 = vmatpush1.bf16.msra.mxu0 0
        %1672 = vmatprep.subr.bf16.mxu0 0
        %1673 = vmatpush1.bf16.msra.mxu0 0
        %1674 = vmatprep.subr.bf16.mxu0 0
        %1675 = vmatpush1.bf16.msra.mxu0 0
        %1676 = vmatprep.subr.bf16.mxu0 0
        %1677 = vmatpush1.bf16.msra.mxu0 0
        %1678 = vmatprep.subr.bf16.mxu0 0
        %1679 = vmatpush1.bf16.msra.mxu0 0
        %1680 = vmatprep.subr.bf16.mxu0 0
        %1681 = vmatpush1.bf16.msra.mxu0 0
        %1682 = vmatprep.subr.bf16.mxu0 0
        %1683 = vmatpush1.bf16.msra.mxu0 0
        %1684 = vmatprep.mubr.bf16.mxu0 0
        %1685 = vmatmul.mubr.bf16.gmra.mrb[0].mxu0 %v1587
        %v1686 = vpop.f32.mrb[0].mxu0
        %v1687 = vadd.f32 0.0, %v1686
        %v1688 = vpop.f32.mrb[0].mxu0
        %v1689 = vpop.f32.mrb[0].mxu0
        %v1690 = vpop.f32.mrb[0].mxu0
        %1691 = vdwg.mxu0
        %v1692 = vadd.f32 %v1485, %v1687
        %v1693 = vadd.f32 %v815, %v1692
        %v1694 = vld [vmem:[#allocation17] sm:$0x1]
        %v1695 = vld [vmem:[#allocation19] sm:$0x1]
        %1696 = vadd.xlane.f32.xlu0 %v1693
        %v1697 = vpop.xlane.xlu0 %1696
        %v1698 = vmul.f32 %v1697, 0.03125
        %v1699 = vmul.f32 %v1693, %v1693
        %1700 = vadd.xlane.f32.xlu0 %v1699
        %v1701 = vpop.xlane.xlu0 %1700
        %v1702 = vmul.f32 %v1701, 0.03125
        %v1703 = vmul.f32 %v1698, %v1698
        %v1704 = vsub.f32 %v1702, %v1703
        %v1705 = vsub.f32 %v1693, %v1698
        %v1706 = vadd.f32 %v1704, 1e-05
        %v1707 = vrsqrt.pop %v1706
        %v1708 = vmul.f32 %v1705, %v1707
        %v1710 = vlaneseq
        %v1711 = vshrl.u32 %v1710, 7
        %v1712 = vsub.s32 0, %v1711
        %v1713 = vrot.slane %v1694, %v1712
        %v1715 = vmul.f32 %v1708, %v1713
        %v1717 = vlaneseq
        %v1718 = vshrl.u32 %v1717, 7
        %v1719 = vsub.s32 0, %v1718
        %v1720 = vrot.slane %v1695, %v1719
        %v1722 = vadd.f32 %v1715, %v1720
        %v1723 = vpack.c.bf16 %v1722, %v1722
        %v1724 = vld [vmem:[#allocation20] sm:$0xf]
        %v1725 = vld [vmem:[#allocation20 + $0x4] sm:$0xf]
        %v1726 = vld [vmem:[#allocation20 + $0x8] sm:$0xf]
        %v1727 = vld [vmem:[#allocation20 + $0xc] sm:$0xf]
        %v1728 = vld [vmem:[#allocation20 + $0x10] sm:$0xf]
        %v1729 = vld [vmem:[#allocation20 + $0x14] sm:$0xf]
        %v1730 = vld [vmem:[#allocation20 + $0x18] sm:$0xf]
        %v1731 = vld [vmem:[#allocation20 + $0x1c] sm:$0xf]
        %v1732 = vld [vmem:[#allocation20 + $0x20] sm:$0xf]
        %v1733 = vld [vmem:[#allocation20 + $0x24] sm:$0xf]
        %v1734 = vld [vmem:[#allocation20 + $0x28] sm:$0xf]
        %v1735 = vld [vmem:[#allocation20 + $0x2c] sm:$0xf]
        %v1736 = vld [vmem:[#allocation20 + $0x30] sm:$0xf]
        %v1737 = vld [vmem:[#allocation20 + $0x34] sm:$0xf]
        %v1738 = vld [vmem:[#allocation20 + $0x38] sm:$0xf]
        %v1739 = vld [vmem:[#allocation20 + $0x3c] sm:$0xf]
        %v1740 = vld [vmem:[#allocation22] sm:$0x1]
        %v1742 = vlaneseq
        %v1743 = vshrl.u32 %v1742, 7
        %v1744 = vsub.s32 0, %v1743
        %v1745 = vrot.slane %v1740, %v1744
        %v1763 = vunpack.c.l.b16 %v1724
        %v1764 = vunpack.c.l.b16 %v1725
        %v1765 = vunpack.c.l.b16 %v1726
        %v1766 = vunpack.c.l.b16 %v1727
        %v1767 = vunpack.c.l.b16 %v1728
        %v1768 = vunpack.c.l.b16 %v1729
        %v1769 = vunpack.c.l.b16 %v1730
        %v1770 = vunpack.c.l.b16 %v1731
        %v1771 = vunpack.c.l.b16 %v1732
        %v1772 = vunpack.c.l.b16 %v1733
        %v1773 = vunpack.c.l.b16 %v1734
        %v1774 = vunpack.c.l.b16 %v1735
        %v1775 = vunpack.c.l.b16 %v1736
        %v1776 = vunpack.c.l.b16 %v1737
        %v1777 = vunpack.c.l.b16 %v1738
        %v1778 = vunpack.c.l.b16 %v1739
        %v1779 = vpack.c.b16 %v1764, %v1763
        %v1780 = vpack.c.b16 %v1766, %v1765
        %v1781 = vpack.c.b16 %v1768, %v1767
        %v1782 = vpack.c.b16 %v1770, %v1769
        %v1783 = vpack.c.b16 %v1772, %v1771
        %v1784 = vpack.c.b16 %v1774, %v1773
        %v1785 = vpack.c.b16 %v1776, %v1775
        %v1786 = vpack.c.b16 %v1778, %v1777
        %1795 = vmatprep.subr.bf16.mxu0 0
        %1796 = vmatpush1.bf16.msra.mxu0 %v1779
        %1797 = vmatprep.subr.bf16.mxu0 0
        %1798 = vmatpush1.bf16.msra.mxu0 %v1780
        %1799 = vmatprep.subr.bf16.mxu0 0
        %1800 = vmatpush1.bf16.msra.mxu0 %v1781
        %1801 = vmatprep.subr.bf16.mxu0 0
        %1802 = vmatpush1.bf16.msra.mxu0 %v1782
        %1803 = vmatprep.subr.bf16.mxu0 0
        %1804 = vmatpush1.bf16.msra.mxu0 %v1783
        %1805 = vmatprep.subr.bf16.mxu0 0
        %1806 = vmatpush1.bf16.msra.mxu0 %v1784
        %1807 = vmatprep.subr.bf16.mxu0 0
        %1808 = vmatpush1.bf16.msra.mxu0 %v1785
        %1809 = vmatprep.subr.bf16.mxu0 0
        %1810 = vmatpush1.bf16.msra.mxu0 %v1786
        %1811 = vmatprep.subr.bf16.mxu0 0
        %1812 = vmatpush1.bf16.msra.mxu0 0
        %1813 = vmatprep.subr.bf16.mxu0 0
        %1814 = vmatpush1.bf16.msra.mxu0 0
        %1815 = vmatprep.subr.bf16.mxu0 0
        %1816 = vmatpush1.bf16.msra.mxu0 0
        %1817 = vmatprep.subr.bf16.mxu0 0
        %1818 = vmatpush1.bf16.msra.mxu0 0
        %1819 = vmatprep.subr.bf16.mxu0 0
        %1820 = vmatpush1.bf16.msra.mxu0 0
        %1821 = vmatprep.subr.bf16.mxu0 0
        %1822 = vmatpush1.bf16.msra.mxu0 0
        %1823 = vmatprep.subr.bf16.mxu0 0
        %1824 = vmatpush1.bf16.msra.mxu0 0
        %1825 = vmatprep.subr.bf16.mxu0 0
        %1826 = vmatpush1.bf16.msra.mxu0 0
        %1827 = vmatprep.mubr.bf16.mxu0 0
        %1828 = vmatmul.mubr.bf16.gmra.mrb[0].mxu0 %v1723
        %v1829 = vpop.f32.mrb[0].mxu0
        %v1830 = vadd.f32 %v1745, %v1829
        %v1831 = vpop.f32.mrb[0].mxu0
        %v1832 = vpop.f32.mrb[0].mxu0
        %v1833 = vpop.f32.mrb[0].mxu0
        %1834 = vdwg.mxu0
        %v1835 = vmax.f32 %v1830, 0.0
        %v1836 = vpack.c.bf16 %v1835, %v1835
        %v1837 = vld [vmem:[#allocation23] sm:$0xf]
        %v1838 = vld [vmem:[#allocation23 + $0x4] sm:$0xf]
        %v1839 = vld [vmem:[#allocation23 + $0x8] sm:$0xf]
        %v1840 = vld [vmem:[#allocation23 + $0xc] sm:$0xf]
        %v1841 = vld [vmem:[#allocation23 + $0x10] sm:$0xf]
        %v1842 = vld [vmem:[#allocation23 + $0x14] sm:$0xf]
        %v1843 = vld [vmem:[#allocation23 + $0x18] sm:$0xf]
        %v1844 = vld [vmem:[#allocation23 + $0x1c] sm:$0xf]
        %v1845 = vld [vmem:[#allocation23 + $0x20] sm:$0xf]
        %v1846 = vld [vmem:[#allocation23 + $0x24] sm:$0xf]
        %v1847 = vld [vmem:[#allocation23 + $0x28] sm:$0xf]
        %v1848 = vld [vmem:[#allocation23 + $0x2c] sm:$0xf]
        %v1849 = vld [vmem:[#allocation23 + $0x30] sm:$0xf]
        %v1850 = vld [vmem:[#allocation23 + $0x34] sm:$0xf]
        %v1851 = vld [vmem:[#allocation23 + $0x38] sm:$0xf]
        %v1852 = vld [vmem:[#allocation23 + $0x3c] sm:$0xf]
        %v1853 = vld [vmem:[#allocation25] sm:$0x1]
        %v1855 = vlaneseq
        %v1856 = vshrl.u32 %v1855, 7
        %v1857 = vsub.s32 0, %v1856
        %v1858 = vrot.slane %v1853, %v1857
        %v1876 = vunpack.c.l.b16 %v1837
        %v1877 = vunpack.c.l.b16 %v1838
        %v1878 = vunpack.c.l.b16 %v1839
        %v1879 = vunpack.c.l.b16 %v1840
        %v1880 = vunpack.c.l.b16 %v1841
        %v1881 = vunpack.c.l.b16 %v1842
        %v1882 = vunpack.c.l.b16 %v1843
        %v1883 = vunpack.c.l.b16 %v1844
        %v1884 = vunpack.c.l.b16 %v1845
        %v1885 = vunpack.c.l.b16 %v1846
        %v1886 = vunpack.c.l.b16 %v1847
        %v1887 = vunpack.c.l.b16 %v1848
        %v1888 = vunpack.c.l.b16 %v1849
        %v1889 = vunpack.c.l.b16 %v1850
        %v1890 = vunpack.c.l.b16 %v1851
        %v1891 = vunpack.c.l.b16 %v1852
        %v1892 = vpack.c.b16 %v1877, %v1876
        %v1893 = vpack.c.b16 %v1879, %v1878
        %v1894 = vpack.c.b16 %v1881, %v1880
        %v1895 = vpack.c.b16 %v1883, %v1882
        %v1896 = vpack.c.b16 %v1885, %v1884
        %v1897 = vpack.c.b16 %v1887, %v1886
        %v1898 = vpack.c.b16 %v1889, %v1888
        %v1899 = vpack.c.b16 %v1891, %v1890
        %1908 = vmatprep.subr.bf16.mxu0 0
        %1909 = vmatpush1.bf16.msra.mxu0 %v1892
        %1910 = vmatprep.subr.bf16.mxu0 0
        %1911 = vmatpush1.bf16.msra.mxu0 %v1893
        %1912 = vmatprep.subr.bf16.mxu0 0
        %1913 = vmatpush1.bf16.msra.mxu0 %v1894
        %1914 = vmatprep.subr.bf16.mxu0 0
        %1915 = vmatpush1.bf16.msra.mxu0 %v1895
        %1916 = vmatprep.subr.bf16.mxu0 0
        %1917 = vmatpush1.bf16.msra.mxu0 %v1896
        %1918 = vmatprep.subr.bf16.mxu0 0
        %1919 = vmatpush1.bf16.msra.mxu0 %v1897
        %1920 = vmatprep.subr.bf16.mxu0 0
        %1921 = vmatpush1.bf16.msra.mxu0 %v1898
        %1922 = vmatprep.subr.bf16.mxu0 0
        %1923 = vmatpush1.bf16.msra.mxu0 %v1899
        %1924 = vmatprep.subr.bf16.mxu0 0
        %1925 = vmatpush1.bf16.msra.mxu0 0
        %1926 = vmatprep.subr.bf16.mxu0 0
        %1927 = vmatpush1.bf16.msra.mxu0 0
        %1928 = vmatprep.subr.bf16.mxu0 0
        %1929 = vmatpush1.bf16.msra.mxu0 0
        %1930 = vmatprep.subr.bf16.mxu0 0
        %1931 = vmatpush1.bf16.msra.mxu0 0
        %1932 = vmatprep.subr.bf16.mxu0 0
        %1933 = vmatpush1.bf16.msra.mxu0 0
        %1934 = vmatprep.subr.bf16.mxu0 0
        %1935 = vmatpush1.bf16.msra.mxu0 0
        %1936 = vmatprep.subr.bf16.mxu0 0
        %1937 = vmatpush1.bf16.msra.mxu0 0
        %1938 = vmatprep.subr.bf16.mxu0 0
        %1939 = vmatpush1.bf16.msra.mxu0 0
        %1940 = vmatprep.mubr.bf16.mxu0 0
        %1941 = vmatmul.mubr.bf16.gmra.mrb[0].mxu0 %v1836
        %v1942 = vpop.f32.mrb[0].mxu0
        %v1943 = vadd.f32 %v1858, %v1942
        %v1944 = vpop.f32.mrb[0].mxu0
        %v1945 = vpop.f32.mrb[0].mxu0
        %v1946 = vpop.f32.mrb[0].mxu0
        %1947 = vdwg.mxu0
        %v1948 = vadd.f32 %v1722, %v1943
        %v1949 = vld [vmem:[#allocation26] sm:$0x1]
        %v1950 = vld [vmem:[#allocation28] sm:$0x1]
        %1951 = vadd.xlane.f32.xlu0 %v1948
        %v1952 = vpop.xlane.xlu0 %1951
        %v1953 = vmul.f32 %v1952, 0.03125
        %v1954 = vmul.f32 %v1948, %v1948
        %1955 = vadd.xlane.f32.xlu0 %v1954
        %v1956 = vpop.xlane.xlu0 %1955
        %v1957 = vmul.f32 %v1956, 0.03125
        %v1958 = vmul.f32 %v1953, %v1953
        %v1959 = vsub.f32 %v1957, %v1958
        %v1960 = vsub.f32 %v1948, %v1953
        %v1961 = vadd.f32 %v1959, 1e-05
        %v1962 = vrsqrt.pop %v1961
        %v1963 = vmul.f32 %v1960, %v1962
        %v1965 = vlaneseq
        %v1966 = vshrl.u32 %v1965, 7
        %v1967 = vsub.s32 0, %v1966
        %v1968 = vrot.slane %v1949, %v1967
        %v1970 = vmul.f32 %v1963, %v1968
        %v1972 = vlaneseq
        %v1973 = vshrl.u32 %v1972, 7
        %v1974 = vsub.s32 0, %v1973
        %v1975 = vrot.slane %v1950, %v1974
        %v1977 = vadd.f32 %v1970, %v1975
        %1978 = vst [vmem:[%s806] sm:$0xff] %v1977
        %s1979 = sand.u32 %s417, 1
        %s1980 = scalar_lea.sflag [#allocation4], %s1979
        %s1981 = sand.u32 %s417, 1
        %s1982 = smul.addr %s1981, 8
        %s1983 = scalar_lea.vmem [#allocation29], %s1982
        %s1984 = sand.u32 %s443, 1
        %s1985 = scalar_lea.sflag [#allocation31], %s1984
        %s1986 = sand.u32 %s443, 1
        %s1987 = smul.addr %s1986, 16
        %s1988 = scalar_lea.vmem [#allocation30], %s1987
        // Predicated region
        $region157: #{tpu_custom_call.1} parent=87 // pred_check
          %p1989 = pneg %p427
        $region158: #{tpu_custom_call.1} parent=87 // pred_check_branch
          %1991 = sbr.rel (%p1989) target = $region160
        $region159: #{tpu_custom_call.1} parent=87 // pred_region
          %s1993 = ssub.s32 128, 128
          %1994 = vsyncadd %s1980, %s1993
          %s1995 = smul.addr %s47, 128
          %s1996 = scalar_lea.hbm %s17, %s1995
          %s1998 = sshll.u32 %s1983, 4
          %s1999 = int_to_ptr.vmem [resolvable:$true] %s1998
          %2001 = dma.vmem_to_hbm [thread:$0]  %s1999, 128, %s1996, %s1980
        $region160: #{tpu_custom_call.1} parent=87 // pred_fallthru
          _
        // Predicated region
        $region161: #{tpu_custom_call.1} parent=87 // pred_check
          %p2002 = pneg %p453
        $region162: #{tpu_custom_call.1} parent=87 // pred_check_branch
          %2004 = sbr.rel (%p2002) target = $region164
        $region163: #{tpu_custom_call.1} parent=87 // pred_region
          %s2006 = ssub.s32 256, 256
          %2007 = vsyncadd %s1985, %s2006
          %s2008 = smul.addr %s47, 2
          %s2009 = smul.addr %s2008, 128
          %s2010 = scalar_lea.hbm %s18, %s2009
          %s2011 = sshll.u32 %s1988, 4
          %s2012 = int_to_ptr.vmem [resolvable:$true] %s2011
          %2017 = dma.vmem_to_hbm [thread:$0]  %s2012, 256, %s2010, %s1985, 128, 128, 8
        $region164: #{tpu_custom_call.1} parent=87 // pred_fallthru
          _
      $region88: #{tpu_custom_call.1} parent=5 // pred_fallthru
        _
      %p2018 = scmp.le.s32.totalorder 2, %s42
      // Predicated region
      $region165: #{tpu_custom_call.1} parent=5 // pred_check
        %p2019 = pneg %p2018
      $region166: #{tpu_custom_call.1} parent=5 // pred_check_branch
        %2021 = sbr.rel (%p2019) target = $region168
      $region167: #{tpu_custom_call.1} parent=5 // pred_region
        %s2022 = ssub.s32 %s42, 2
        // Predicated region
        $region169: #{tpu_custom_call.1} parent=167 // pred_check
          %p2023 = pneg %p433
        $region170: #{tpu_custom_call.1} parent=167 // pred_check_branch
          %2025 = sbr.rel (%p2023) target = $region172
        $region171: #{tpu_custom_call.1} parent=167 // pred_region
          %s2026 = sand.u32 %s418, 1
          %s2027 = scalar_lea.sflag [#allocation4], %s2026
          %s2028 = sand.u32 %s418, 1
          %s2029 = smul.addr %s2028, 8
          %s2030 = scalar_lea.vmem [#allocation29], %s2029
          %2031 = dma.done %s2027, 128
        $region172: #{tpu_custom_call.1} parent=167 // pred_fallthru
          _
        // Predicated region
        $region173: #{tpu_custom_call.1} parent=167 // pred_check
          %p2032 = pneg %p459
        $region174: #{tpu_custom_call.1} parent=167 // pred_check_branch
          %2034 = sbr.rel (%p2032) target = $region176
        $region175: #{tpu_custom_call.1} parent=167 // pred_region
          %s2035 = sand.u32 %s444, 1
          %s2036 = scalar_lea.sflag [#allocation31], %s2035
          %s2037 = sand.u32 %s444, 1
          %s2038 = smul.addr %s2037, 16
          %s2039 = scalar_lea.vmem [#allocation30], %s2038
          %2040 = dma.done %s2036, 256
        $region176: #{tpu_custom_call.1} parent=167 // pred_fallthru
          _
      $region168: #{tpu_custom_call.1} parent=5 // pred_fallthru
        _
    $region6: #{tpu_custom_call.1} parent=1 // loop_footer
      %s46 = sadd.s32 1, %s42
    $region7: #{tpu_custom_call.1} parent=1 // loop_footer_branch
      %41 = sbr.rel target = $region3
    $region8: #{tpu_custom_call.1} parent=1 // loop_exit
      _
    %2041 = vsyncpa [#allocation3], 1
    %s2042 = scalar_lea.sflag [#allocation3], 1
    %2043 = vsyncpa %s2042, 1
    %2044 = vsyncpa [#allocation6], 1
    %2045 = vsyncpa [#allocation9], 1
    %2046 = vsyncpa [#allocation12], 1
    %2047 = vsyncpa [#allocation15], 1
    %2048 = vsyncpa [#allocation18], 1
    %2049 = vsyncpa [#allocation21], 1
    %2050 = vsyncpa [#allocation24], 1
    %2051 = vsyncpa [#allocation27], 1
    %2052 = vsyncpa [#allocation4], 1
    %s2053 = scalar_lea.sflag [#allocation4], 1
    %2054 = vsyncpa %s2053, 1
    %2055 = vsyncpa [#allocation31], 1
    %s2056 = scalar_lea.sflag [#allocation31], 1
    %2057 = vsyncpa %s2056, 1

</llo_original>
